<compile_context>
chip_gen: v5e
topology: v5e:2x2
jax: 0.10.0
libtpu: 0.0.40
codegen_flags: <defaults>
</compile_context>

<pallas_src>
import math

import numpy as np

import jax
import jax.numpy as jnp
from jax.experimental import pallas as pl
from jax.experimental.pallas import tpu as pltpu


# ----------------------------- rotary tables (host-side glue) ----------------

def make_axial_pos(h, w):
    h_pos = jnp.linspace(-1.0, 1.0, h + 1)
    w_pos = jnp.linspace(-1.0, 1.0, w + 1)
    h_pos = (h_pos[:-1] + h_pos[1:]) / 2
    w_pos = (w_pos[:-1] + w_pos[1:]) / 2
    hh, ww = jnp.meshgrid(h_pos, w_pos, indexing="ij")
    return jnp.stack([hh, ww], axis=-1).reshape(h * w, 2)


def build_theta(dim, head_dim):
    """Reproduces SelfAttention.__init__'s `theta` buffer: (813, n_heads, head_dim//2)."""
    n_heads = dim // head_dim
    log_min = math.log(math.pi)
    log_max = math.log(10 * math.pi)
    freqs = jnp.exp(jnp.linspace(log_min, log_max, n_heads * head_dim // 4 + 1))[:-1]
    freqs = freqs.reshape(head_dim // 4, n_heads).T          # (n_heads, head_dim//4)
    pos = make_axial_pos(28, 28)
    pos = jnp.concatenate(
        [jnp.zeros((1, 2)), pos, pos[-28:] + (pos[-28:] - pos[-56:-28])], axis=0)
    theta_h = pos[:, None, 0:1] * freqs                      # (813, n_heads, head_dim//4)
    theta_w = pos[:, None, 1:2] * freqs
    return jnp.concatenate([theta_h, theta_w], axis=-1)      # (813, n_heads, head_dim//2)


# ----------------------------- Pallas kernel ---------------------------------

def make_self_attention_kernel(S_pad, dim, head_dim, tq, tk):
    H = dim // head_dim
    hd = head_dim
    d_rot = hd // 2
    half = dim // 2
    scale = 1.0 / math.sqrt(hd)      # folded into q (hd elems, not S^2)
    n_k = S_pad // tk

    def kernel(x_ref, cos_ref, sin_ref, gamma_ref, beta_ref,
               wqkv_ref, bqkv_ref, wout_ref, bout_ref,
               o_ref,
               q_s, k_s, v_s, m_s, l_s, acc_s):
        qi = pl.program_id(1)
        ki = pl.program_id(2)

        # ---- once per batch element: LayerNorm + qkv + lane-dense RoPE ------
        @pl.when((qi == 0) & (ki == 0))
        def _():
            x = x_ref[0]                                            # (S_pad, dim) f32
            mean = jnp.mean(x, axis=-1, keepdims=True)
            var = jnp.mean(jnp.square(x - mean), axis=-1, keepdims=True)
            xn = (x - mean) * jax.lax.rsqrt(var + 1e-5)
            xn = xn * gamma_ref[...] + beta_ref[...]

            # fused qkv projection: one lane-dense bf16 MXU matmul, f32 acc
            qkv = jnp.dot(xn.astype(jnp.bfloat16), wqkv_ref[...],
                          preferred_element_type=jnp.float32) + bqkv_ref[...]
            qf = qkv[:, :dim]            # q / k columns are host-permuted to
            kf = qkv[:, dim:2 * dim]     # [all first halves | all second halves]
            vf = qkv[:, 2 * dim:]

            # Lane-dense RoPE on the full (S_pad, dim) slab:
            #   y = x * [cos|cos] + halfswap(x) * [-sin|+sin]
            def rope(t):
                sw = jnp.concatenate([t[:, half:], t[:, :half]], axis=-1)
                return t * cos_ref[...] + sw * sin_ref[...]

            # permuted (S, dim) -> canonical per-head (H, S, hd)
            def split_heads_rot(t):
                t1 = t[:, :half].reshape(S_pad, H, d_rot)
                t2 = t[:, half:].reshape(S_pad, H, d_rot)
                return jnp.transpose(jnp.concatenate([t1, t2], axis=-1), (1, 0, 2))

            q_s[...] = (split_heads_rot(rope(qf)) * scale).astype(jnp.bfloat16)
            k_s[...] = split_heads_rot(rope(kf)).astype(jnp.bfloat16)
            v_s[...] = jnp.transpose(vf.reshape(S_pad, H, hd),
                                     (1, 0, 2)).astype(jnp.bfloat16)

        # ---- online-softmax state init (per q tile) --------------------------
        @pl.when(ki == 0)
        def _():
            m_s[...] = jnp.full_like(m_s, -1e30)
            l_s[...] = jnp.zeros_like(l_s)
            acc_s[...] = jnp.zeros_like(acc_s)

        q_start = pl.multiple_of(qi * tq, tq)
        k_start = pl.multiple_of(ki * tk, tk)

        # ---- flash update; causal tiles strictly above the diagonal skipped --
        @pl.when(k_start <= q_start + (tq - 1))
        def _():
            q_t = q_s[:, pl.ds(q_start, tq), :]                     # (H, tq, hd) bf16
            k_t = k_s[:, pl.ds(k_start, tk), :]
            v_t = v_s[:, pl.ds(k_start, tk), :]

            s = jnp.einsum("hqd,hkd->hqk", q_t, k_t,
                           preferred_element_type=jnp.float32)      # (H, tq, tk)
            rows = q_start + jax.lax.broadcasted_iota(jnp.int32, (tq, tk), 0)
            cols = k_start + jax.lax.broadcasted_iota(jnp.int32, (tq, tk), 1)
            s = s + jnp.where(rows >= cols, 0.0, -1e30)[None]       # additive causal bias

            m_prev = m_s[...]
            m_new = jnp.maximum(m_prev, jnp.max(s, axis=-1, keepdims=True))
            alpha = jnp.exp(m_prev - m_new)
            p = jnp.exp(s - m_new)
            l_s[...] = alpha * l_s[...] + jnp.sum(p, axis=-1, keepdims=True)
            acc_s[...] = alpha * acc_s[...] + jnp.einsum(
                "hqk,hkd->hqd", p.astype(jnp.bfloat16), v_t,
                preferred_element_type=jnp.float32)
            m_s[...] = m_new

        # ---- finalize: normalize, merge heads lane-dense, out projection -----
        @pl.when(ki == n_k - 1)
        def _():
            o = acc_s[...] * pl.reciprocal(l_s[...], approx=True)   # (H, tq, hd) f32
            o = jnp.transpose(o, (1, 0, 2)).reshape(tq, dim)        # (tq, dim)
            y = jnp.dot(o.astype(jnp.bfloat16), wout_ref[...],
                        preferred_element_type=jnp.float32) + bout_ref[...]
            o_ref[...] = y.reshape(1, tq, dim).astype(o_ref.dtype)

    return kernel


def _vmem_limit_bytes():
    """Generation-aware scoped-VMEM limit (~96 MiB on v5e/v6e, ~48 MiB on v7x)."""
    try:
        cap = int(pltpu.get_tpu_info().vmem_capacity_bytes)
    except Exception:
        cap = 64 * 1024 * 1024                 # conservative (v7x-sized) fallback
    return max(32 * 1024 * 1024, min((cap * 3) // 4, 96 * 1024 * 1024))


def self_attention_pallas(x, theta_pos, gamma, beta, wqkv, bqkv, wout, bout,
                          head_dim):
    """x: (B, S, dim) f32; theta_pos: (S, n_heads, head_dim//2) rotary angles
       (theta[p], shared across batch).  Causal mask (the AR-image path) is
       generated in-kernel."""
    B, S, dim = x.shape
    H = dim // head_dim
    hd = head_dim
    d_rot = hd // 2
    half = dim // 2
    assert H * hd == dim and 2 * d_rot == hd
    assert theta_pos.shape == (S, H, d_rot)

    # ---- sequence tiling / padding (lane/sublane friendly) -------------------
    tq = 128 if S >= 128 else ((S + 7) // 8) * 8     # TODO(synk): sweep 256/512 on v6e
    tk = tq
    S_pad = ((S + tq - 1) // tq) * tq
    n_q = S_pad // tq
    n_k = S_pad // tk

    x_p = x if S_pad == S else jnp.pad(x, ((0, 0), (0, S_pad - S), (0, 0)))

    # ---- full-width, pre-signed, head-half-permuted rotary tables (S, dim) ---
    cos_h = jnp.cos(theta_pos).astype(jnp.float32).reshape(S, half)
    sin_h = jnp.sin(theta_pos).astype(jnp.float32).reshape(S, half)
    cosf = jnp.concatenate([cos_h, cos_h], axis=-1)              # [cos | cos]
    sinf = jnp.concatenate([-sin_h, sin_h], axis=-1)             # [-sin | +sin]
    if S_pad != S:
        cosf = jnp.pad(cosf, ((0, S_pad - S), (0, 0)), constant_values=1.0)
        sinf = jnp.pad(sinf, ((0, S_pad - S), (0, 0)))

    # ---- permute q/k columns of W_qkv so rotate-half is one full-width swap --
    idx = np.arange(dim).reshape(H, hd)
    perm = np.concatenate([idx[:, :d_rot].reshape(-1), idx[:, d_rot:].reshape(-1)])
    wqkv = jnp.asarray(wqkv, jnp.float32)
    wqkv_p = jnp.concatenate(
        [wqkv[:, :dim][:, perm], wqkv[:, dim:2 * dim][:, perm], wqkv[:, 2 * dim:]],
        axis=1).astype(jnp.bfloat16)
    bq = jnp.asarray(bqkv, jnp.float32).reshape(-1)
    bqkv_p = jnp.concatenate(
        [bq[:dim][perm], bq[dim:2 * dim][perm], bq[2 * dim:]]
    ).reshape(1, 3 * dim).astype(jnp.float32)

    wout_bf = jnp.asarray(wout, jnp.float32).astype(jnp.bfloat16)
    gamma2 = jnp.asarray(gamma, jnp.float32).reshape(1, dim)
    beta2 = jnp.asarray(beta, jnp.float32).reshape(1, dim)
    bout2 = jnp.asarray(bout, jnp.float32).reshape(1, dim)

    kernel = make_self_attention_kernel(S_pad, dim, hd, tq, tk)

    def invariant(shape):
        # weights / tables never change across grid steps -> single-buffer.
        return pl.BlockSpec(shape, lambda b, qi, ki: tuple(0 for _ in shape),
                            pipeline_mode=pl.Buffered(1))

    grid_spec = pltpu.PrefetchScalarGridSpec(
        num_scalar_prefetch=0,
        grid=(B, n_q, n_k),
        in_specs=[
            pl.BlockSpec((1, S_pad, dim), lambda b, qi, ki: (b, 0, 0)),  # x
            invariant((S_pad, dim)),                                     # cos table
            invariant((S_pad, dim)),                                     # sin table
            invariant((1, dim)),                                         # gamma
            invariant((1, dim)),                                         # beta
            invariant((dim, 3 * dim)),                                   # W_qkv (bf16)
            invariant((1, 3 * dim)),                                     # b_qkv
            invariant((dim, dim)),                                       # W_out (bf16)
            invariant((1, dim)),                                         # b_out
        ],
        out_specs=pl.BlockSpec((1, tq, dim), lambda b, qi, ki: (b, qi, 0)),
        scratch_shapes=[
            pltpu.VMEM((H, S_pad, hd), jnp.bfloat16),   # q (roped, pre-scaled)
            pltpu.VMEM((H, S_pad, hd), jnp.bfloat16),   # k (roped)
            pltpu.VMEM((H, S_pad, hd), jnp.bfloat16),   # v
            pltpu.VMEM((H, tq, 1), jnp.float32),        # online-softmax m
            pltpu.VMEM((H, tq, 1), jnp.float32),        # online-softmax l
            pltpu.VMEM((H, tq, hd), jnp.float32),       # acc
        ],
    )

    out = pl.pallas_call(
        kernel,
        out_shape=jax.ShapeDtypeStruct((B, S_pad, dim), x.dtype),
        grid_spec=grid_spec,
        compiler_params=pltpu.CompilerParams(
            # batch is independent -> parallel (feeds both v7x TCs for B>=2);
            # q/k carry scratch state across steps -> arbitrary.
            dimension_semantics=("parallel", "arbitrary", "arbitrary"),
            vmem_limit_bytes=_vmem_limit_bytes()),
    )(x_p, cosf, sinf, gamma2, beta2, wqkv_p, bqkv_p, wout_bf, bout2)

    return out[:, :S, :]


# ----------------------------- pure-JAX reference (f32) ----------------------

def self_attention_ref(x, m, theta_pos, gamma, beta, wqkv, bqkv, wout, bout,
                       head_dim):
    B, S, dim = x.shape
    H = dim // head_dim
    d = head_dim // 2
    mean = x.mean(-1, keepdims=True)
    var = ((x - mean) ** 2).mean(-1, keepdims=True)
    xn = (x - mean) / jnp.sqrt(var + 1e-5) * gamma.reshape(1, 1, dim) + beta.reshape(1, 1, dim)
    qkv = xn @ wqkv + bqkv.reshape(1, 1, -1)
    qkv = qkv.reshape(B, S, 3, H, head_dim).transpose(0, 3, 2, 1, 4)
    q, k, v = qkv[:, :, 0], qkv[:, :, 1], qkv[:, :, 2]        # (B, H, S, hd)

    theta_bh = jnp.transpose(theta_pos, (1, 0, 2))[None]      # (1, H, S, d)
    cos, sin = jnp.cos(theta_bh), jnp.sin(theta_bh)

    def rope(t):
        t1, t2 = t[..., :d], t[..., d:]
        return jnp.concatenate([t1 * cos - t2 * sin, t2 * cos + t1 * sin], axis=-1)

    q, k = rope(q), rope(k)
    s = jnp.einsum("bhqd,bhkd->bhqk", q, k) / math.sqrt(head_dim)
    s = jnp.where(m[None, None] > 0, s, -1e30)
    p = jax.nn.softmax(s, axis=-1)
    o = jnp.einsum("bhqk,bhkd->bhqd", p, v)
    o = o.transpose(0, 2, 1, 3).reshape(B, S, dim)
    return o @ wout + bout.reshape(1, 1, -1)


# ----------------------------- main -------------------------------------------

if __name__ == "__main__":
    B, S, DIM, HEAD_DIM = 2, 8, 32, 8
    N_HEADS = DIM // HEAD_DIM

    key = jax.random.PRNGKey(0)
    keys = jax.random.split(key, 8)

    x = jax.random.normal(keys[0], (B, S, DIM), jnp.float32)

    # Deterministic parameter init (shapes from the module's __init__).
    # NOTE: the PyTorch module zero-inits out_proj; we use small nonzero values
    # so the output-projection matmul path is actually exercised.
    gamma = 1.0 + 0.02 * jax.random.normal(keys[1], (1, DIM), jnp.float32)
    beta = 0.02 * jax.random.normal(keys[2], (1, DIM), jnp.float32)
    wqkv = 0.05 * jax.random.normal(keys[3], (DIM, 3 * DIM), jnp.float32)
    bqkv = 0.02 * jax.random.normal(keys[4], (1, 3 * DIM), jnp.float32)
    wout = 0.05 * jax.random.normal(keys[5], (DIM, DIM), jnp.float32)
    bout = 0.02 * jax.random.normal(keys[6], (1, DIM), jnp.float32)

    # Rotary angles: theta[p] gather done host-side (glue); shared across batch
    # for the AR image path.
    theta = build_theta(DIM, HEAD_DIM)                        # (813, H, head_dim//2)
    p = jnp.arange(1, S + 1)                                  # shared position ids
    theta_pos = theta[p]                                      # (S, H, head_dim//2)

    # Causal mask (what the kernel generates in-kernel) — used by the reference.
    m = jnp.tril(jnp.ones((S, S), jnp.float32))

    out = self_attention_pallas(x, theta_pos, gamma, beta, wqkv, bqkv, wout,
                                bout, HEAD_DIM)
    out = jax.block_until_ready(out)

    ref = self_attention_ref(x, m, theta_pos, gamma, beta, wqkv, bqkv, wout,
                             bout, HEAD_DIM)
    assert out.shape == (B, S, DIM)
    assert bool(jnp.all(jnp.isfinite(out)))
    # bf16 MXU operands + approx reciprocal -> compare against f32 reference
    # with a correspondingly relaxed tolerance.
    err = float(jnp.max(jnp.abs(out - ref)))
    assert bool(jnp.allclose(out, ref, rtol=5e-2, atol=5e-3)), err
    print("KERNEL_OK")
</pallas_src>

<mosaic_0001>
module attributes {stable_mosaic.version = 11 : i64} {
  func.func @kernel(%arg0: i32, %arg1: i32, %arg2: i32, %arg3: memref<1x8x32xf32, #tpu.memory_space<vmem>>, %arg4: memref<8x32xf32, #tpu.memory_space<vmem>>, %arg5: memref<8x32xf32, #tpu.memory_space<vmem>>, %arg6: memref<1x32xf32, #tpu.memory_space<vmem>>, %arg7: memref<1x32xf32, #tpu.memory_space<vmem>>, %arg8: memref<32x96xbf16, #tpu.memory_space<vmem>>, %arg9: memref<1x96xf32, #tpu.memory_space<vmem>>, %arg10: memref<32x32xbf16, #tpu.memory_space<vmem>>, %arg11: memref<1x32xf32, #tpu.memory_space<vmem>>, %arg12: memref<1x8x32xf32, #tpu.memory_space<vmem>>, %arg13: memref<4x8x8xbf16, #tpu.memory_space<vmem>>, %arg14: memref<4x8x8xbf16, #tpu.memory_space<vmem>>, %arg15: memref<4x8x8xbf16, #tpu.memory_space<vmem>>, %arg16: memref<4x8x1xf32, #tpu.memory_space<vmem>>, %arg17: memref<4x8x1xf32, #tpu.memory_space<vmem>>, %arg18: memref<4x8x8xf32, #tpu.memory_space<vmem>>) attributes {dimension_semantics = [#tpu.dimension_semantics<parallel>, #tpu.dimension_semantics<arbitrary>, #tpu.dimension_semantics<arbitrary>], iteration_bounds = array<i64: 2, 1, 1>, scalar_prefetch = 0 : i64, scratch_operands = 6 : i64, tpu.core_type = #tpu.core_type<tc>, window_params = [{transform_indices = @transform_0, window_bounds = array<i64: 1, 8, 32>}, {pipeline_mode = #tpu.pipeline_mode<synchronous>, transform_indices = @transform_1, window_bounds = array<i64: 8, 32>}, {pipeline_mode = #tpu.pipeline_mode<synchronous>, transform_indices = @transform_2, window_bounds = array<i64: 8, 32>}, {pipeline_mode = #tpu.pipeline_mode<synchronous>, transform_indices = @transform_3, window_bounds = array<i64: 1, 32>}, {pipeline_mode = #tpu.pipeline_mode<synchronous>, transform_indices = @transform_4, window_bounds = array<i64: 1, 32>}, {pipeline_mode = #tpu.pipeline_mode<synchronous>, transform_indices = @transform_5, window_bounds = array<i64: 32, 96>}, {pipeline_mode = #tpu.pipeline_mode<synchronous>, transform_indices = @transform_6, window_bounds = array<i64: 1, 96>}, {pipeline_mode = #tpu.pipeline_mode<synchronous>, transform_indices = @transform_7, window_bounds = array<i64: 32, 32>}, {pipeline_mode = #tpu.pipeline_mode<synchronous>, transform_indices = @transform_8, window_bounds = array<i64: 1, 32>}, {transform_indices = @transform_9, window_bounds = array<i64: 1, 8, 32>}]} {
    %c0_i32 = arith.constant 0 : i32
    %0 = arith.cmpi eq, %arg1, %c0_i32 : i32
    %c0_i32_0 = arith.constant 0 : i32
    %1 = arith.cmpi eq, %arg2, %c0_i32_0 : i32
    %2 = arith.andi %0, %1 : i1
    %3 = arith.extui %2 : i1 to i32
    %c0_i32_1 = arith.constant 0 : i32
    %4 = arith.cmpi ne, %3, %c0_i32_1 : i32
    scf.if %4 {
      %c0 = arith.constant 0 : index
      %c0_8 = arith.constant 0 : index
      %c0_9 = arith.constant 0 : index
      %19 = vector.load %arg3[%c0, %c0_8, %c0_9] : memref<1x8x32xf32, #tpu.memory_space<vmem>>, vector<1x8x32xf32>
      %20 = vector.shape_cast %19 : vector<1x8x32xf32> to vector<8x32xf32>
      %cst = arith.constant dense<0.000000e+00> : vector<8xf32>
      %21 = vector.multi_reduction <add>, %20, %cst [1] : vector<8x32xf32> to vector<8xf32>
      %22 = vector.shape_cast %21 : vector<8xf32> to vector<8x1xf32>
      %cst_10 = arith.constant 3.200000e+01 : f32
      %23 = vector.broadcast %cst_10 : f32 to vector<8x1xf32>
      %24 = arith.divf %22, %23 : vector<8x1xf32>
      %25 = vector.broadcast %24 : vector<8x1xf32> to vector<8x32xf32>
      %26 = arith.subf %20, %25 : vector<8x32xf32>
      %27 = arith.mulf %26, %26 : vector<8x32xf32>
      %cst_11 = arith.constant dense<0.000000e+00> : vector<8xf32>
      %28 = vector.multi_reduction <add>, %27, %cst_11 [1] : vector<8x32xf32> to vector<8xf32>
      %29 = vector.shape_cast %28 : vector<8xf32> to vector<8x1xf32>
      %cst_12 = arith.constant 3.200000e+01 : f32
      %30 = vector.broadcast %cst_12 : f32 to vector<8x1xf32>
      %31 = arith.divf %29, %30 : vector<8x1xf32>
      %32 = vector.broadcast %24 : vector<8x1xf32> to vector<8x32xf32>
      %33 = arith.subf %20, %32 : vector<8x32xf32>
      %cst_13 = arith.constant 9.99999974E-6 : f32
      %34 = vector.broadcast %cst_13 : f32 to vector<8x1xf32>
      %35 = arith.addf %31, %34 : vector<8x1xf32>
      %36 = math.rsqrt %35 : vector<8x1xf32>
      %37 = vector.broadcast %36 : vector<8x1xf32> to vector<8x32xf32>
      %38 = arith.mulf %33, %37 : vector<8x32xf32>
      %c0_14 = arith.constant 0 : index
      %c0_15 = arith.constant 0 : index
      %39 = vector.load %arg6[%c0_14, %c0_15] : memref<1x32xf32, #tpu.memory_space<vmem>>, vector<1x32xf32>
      %40 = vector.broadcast %39 : vector<1x32xf32> to vector<8x32xf32>
      %41 = arith.mulf %38, %40 : vector<8x32xf32>
      %c0_16 = arith.constant 0 : index
      %c0_17 = arith.constant 0 : index
      %42 = vector.load %arg7[%c0_16, %c0_17] : memref<1x32xf32, #tpu.memory_space<vmem>>, vector<1x32xf32>
      %43 = vector.broadcast %42 : vector<1x32xf32> to vector<8x32xf32>
      %44 = arith.addf %41, %43 : vector<8x32xf32>
      %45 = arith.truncf %44 : vector<8x32xf32> to vector<8x32xbf16>
      %c0_18 = arith.constant 0 : index
      %c0_19 = arith.constant 0 : index
      %46 = vector.load %arg8[%c0_18, %c0_19] : memref<32x96xbf16, #tpu.memory_space<vmem>>, vector<32x96xbf16>
      %cst_20 = arith.constant dense<0.000000e+00> : vector<8x96xf32>
      %47 = tpu.matmul %45, %46, %cst_20 {dimension_numbers = #tpu.dot_dimension_numbers<[1], [0], [0], [1], [0, 0, 1, 1], [], []>} : vector<8x32xbf16>, vector<32x96xbf16>, vector<8x96xf32> -> vector<8x96xf32>
      %c0_21 = arith.constant 0 : index
      %c0_22 = arith.constant 0 : index
      %48 = vector.load %arg9[%c0_21, %c0_22] : memref<1x96xf32, #tpu.memory_space<vmem>>, vector<1x96xf32>
      %49 = vector.broadcast %48 : vector<1x96xf32> to vector<8x96xf32>
      %50 = arith.addf %47, %49 : vector<8x96xf32>
      %51 = vector.extract_strided_slice %50 {offsets = [0, 0], sizes = [8, 32], strides = [1, 1]} : vector<8x96xf32> to vector<8x32xf32>
      %52 = vector.extract_strided_slice %50 {offsets = [0, 32], sizes = [8, 32], strides = [1, 1]} : vector<8x96xf32> to vector<8x32xf32>
      %53 = vector.extract_strided_slice %50 {offsets = [0, 64], sizes = [8, 32], strides = [1, 1]} : vector<8x96xf32> to vector<8x32xf32>
      %54 = vector.extract_strided_slice %51 {offsets = [0, 16], sizes = [8, 16], strides = [1, 1]} : vector<8x32xf32> to vector<8x16xf32>
      %55 = vector.extract_strided_slice %51 {offsets = [0, 0], sizes = [8, 16], strides = [1, 1]} : vector<8x32xf32> to vector<8x16xf32>
      %56 = tpu.concatenate %54, %55 in 1 : vector<8x16xf32>, vector<8x16xf32> -> vector<8x32xf32>
      %c0_23 = arith.constant 0 : index
      %c0_24 = arith.constant 0 : index
      %57 = vector.load %arg4[%c0_23, %c0_24] : memref<8x32xf32, #tpu.memory_space<vmem>>, vector<8x32xf32>
      %58 = arith.mulf %51, %57 : vector<8x32xf32>
      %c0_25 = arith.constant 0 : index
      %c0_26 = arith.constant 0 : index
      %59 = vector.load %arg5[%c0_25, %c0_26] : memref<8x32xf32, #tpu.memory_space<vmem>>, vector<8x32xf32>
      %60 = arith.mulf %56, %59 : vector<8x32xf32>
      %61 = arith.addf %58, %60 : vector<8x32xf32>
      %62 = vector.extract_strided_slice %61 {offsets = [0, 0], sizes = [8, 16], strides = [1, 1]} : vector<8x32xf32> to vector<8x16xf32>
      %63 = vector.shape_cast %62 : vector<8x16xf32> to vector<8x4x4xf32>
      %64 = vector.extract_strided_slice %61 {offsets = [0, 16], sizes = [8, 16], strides = [1, 1]} : vector<8x32xf32> to vector<8x16xf32>
      %65 = vector.shape_cast %64 : vector<8x16xf32> to vector<8x4x4xf32>
      %66 = tpu.concatenate %63, %65 in 2 : vector<8x4x4xf32>, vector<8x4x4xf32> -> vector<8x4x8xf32>
      %67 = tpu.transpose %66, [1, 0, 2] : vector<8x4x8xf32> -> vector<4x8x8xf32>
      %cst_27 = arith.constant 0.353553385 : f32
      %68 = vector.broadcast %cst_27 : f32 to vector<4x8x8xf32>
      %69 = arith.mulf %67, %68 : vector<4x8x8xf32>
      %70 = arith.truncf %69 : vector<4x8x8xf32> to vector<4x8x8xbf16>
      %c0_28 = arith.constant 0 : index
      %c0_29 = arith.constant 0 : index
      %c0_30 = arith.constant 0 : index
      %71 = vector.load %arg13[%c0_28, %c0_29, %c0_30] : memref<4x8x8xbf16, #tpu.memory_space<vmem>>, vector<4x8x8xbf16>
      tpu.vector_store %arg13[%c0_28, %c0_29, %c0_30], %70 {strides = array<i32>} : memref<4x8x8xbf16, #tpu.memory_space<vmem>>, vector<4x8x8xbf16>,
      %72 = vector.extract_strided_slice %52 {offsets = [0, 16], sizes = [8, 16], strides = [1, 1]} : vector<8x32xf32> to vector<8x16xf32>
      %73 = vector.extract_strided_slice %52 {offsets = [0, 0], sizes = [8, 16], strides = [1, 1]} : vector<8x32xf32> to vector<8x16xf32>
      %74 = tpu.concatenate %72, %73 in 1 : vector<8x16xf32>, vector<8x16xf32> -> vector<8x32xf32>
      %c0_31 = arith.constant 0 : index
      %c0_32 = arith.constant 0 : index
      %75 = vector.load %arg4[%c0_31, %c0_32] : memref<8x32xf32, #tpu.memory_space<vmem>>, vector<8x32xf32>
      %76 = arith.mulf %52, %75 : vector<8x32xf32>
      %c0_33 = arith.constant 0 : index
      %c0_34 = arith.constant 0 : index
      %77 = vector.load %arg5[%c0_33, %c0_34] : memref<8x32xf32, #tpu.memory_space<vmem>>, vector<8x32xf32>
      %78 = arith.mulf %74, %77 : vector<8x32xf32>
      %79 = arith.addf %76, %78 : vector<8x32xf32>
      %80 = vector.extract_strided_slice %79 {offsets = [0, 0], sizes = [8, 16], strides = [1, 1]} : vector<8x32xf32> to vector<8x16xf32>
      %81 = vector.shape_cast %80 : vector<8x16xf32> to vector<8x4x4xf32>
      %82 = vector.extract_strided_slice %79 {offsets = [0, 16], sizes = [8, 16], strides = [1, 1]} : vector<8x32xf32> to vector<8x16xf32>
      %83 = vector.shape_cast %82 : vector<8x16xf32> to vector<8x4x4xf32>
      %84 = tpu.concatenate %81, %83 in 2 : vector<8x4x4xf32>, vector<8x4x4xf32> -> vector<8x4x8xf32>
      %85 = tpu.transpose %84, [1, 0, 2] : vector<8x4x8xf32> -> vector<4x8x8xf32>
      %86 = arith.truncf %85 : vector<4x8x8xf32> to vector<4x8x8xbf16>
      %c0_35 = arith.constant 0 : index
      %c0_36 = arith.constant 0 : index
      %c0_37 = arith.constant 0 : index
      %87 = vector.load %arg14[%c0_35, %c0_36, %c0_37] : memref<4x8x8xbf16, #tpu.memory_space<vmem>>, vector<4x8x8xbf16>
      tpu.vector_store %arg14[%c0_35, %c0_36, %c0_37], %86 {strides = array<i32>} : memref<4x8x8xbf16, #tpu.memory_space<vmem>>, vector<4x8x8xbf16>,
      %88 = vector.shape_cast %53 : vector<8x32xf32> to vector<8x4x8xf32>
      %89 = tpu.transpose %88, [1, 0, 2] : vector<8x4x8xf32> -> vector<4x8x8xf32>
      %90 = arith.truncf %89 : vector<4x8x8xf32> to vector<4x8x8xbf16>
      %c0_38 = arith.constant 0 : index
      %c0_39 = arith.constant 0 : index
      %c0_40 = arith.constant 0 : index
      %91 = vector.load %arg15[%c0_38, %c0_39, %c0_40] : memref<4x8x8xbf16, #tpu.memory_space<vmem>>, vector<4x8x8xbf16>
      tpu.vector_store %arg15[%c0_38, %c0_39, %c0_40], %90 {strides = array<i32>} : memref<4x8x8xbf16, #tpu.memory_space<vmem>>, vector<4x8x8xbf16>,
    } else {
    }
    %c0_i32_2 = arith.constant 0 : i32
    %5 = arith.cmpi eq, %arg2, %c0_i32_2 : i32
    %6 = arith.extui %5 : i1 to i32
    %c0_i32_3 = arith.constant 0 : i32
    %7 = arith.cmpi ne, %6, %c0_i32_3 : i32
    scf.if %7 {
      %cst = arith.constant -1.000000e+30 : f32
      %19 = vector.broadcast %cst : f32 to vector<4x8x1xf32>
      %c0 = arith.constant 0 : index
      %c0_8 = arith.constant 0 : index
      %c0_9 = arith.constant 0 : index
      %20 = vector.load %arg16[%c0, %c0_8, %c0_9] : memref<4x8x1xf32, #tpu.memory_space<vmem>>, vector<4x8x1xf32>
      tpu.vector_store %arg16[%c0, %c0_8, %c0_9], %19 {strides = array<i32>} : memref<4x8x1xf32, #tpu.memory_space<vmem>>, vector<4x8x1xf32>,
      %cst_10 = arith.constant 0.000000e+00 : f32
      %21 = vector.broadcast %cst_10 : f32 to vector<4x8x1xf32>
      %c0_11 = arith.constant 0 : index
      %c0_12 = arith.constant 0 : index
      %c0_13 = arith.constant 0 : index
      %22 = vector.load %arg17[%c0_11, %c0_12, %c0_13] : memref<4x8x1xf32, #tpu.memory_space<vmem>>, vector<4x8x1xf32>
      tpu.vector_store %arg17[%c0_11, %c0_12, %c0_13], %21 {strides = array<i32>} : memref<4x8x1xf32, #tpu.memory_space<vmem>>, vector<4x8x1xf32>,
      %cst_14 = arith.constant 0.000000e+00 : f32
      %23 = vector.broadcast %cst_14 : f32 to vector<4x8x8xf32>
      %c0_15 = arith.constant 0 : index
      %c0_16 = arith.constant 0 : index
      %c0_17 = arith.constant 0 : index
      %24 = vector.load %arg18[%c0_15, %c0_16, %c0_17] : memref<4x8x8xf32, #tpu.memory_space<vmem>>, vector<4x8x8xf32>
      tpu.vector_store %arg18[%c0_15, %c0_16, %c0_17], %23 {strides = array<i32>} : memref<4x8x8xf32, #tpu.memory_space<vmem>>, vector<4x8x8xf32>,
    } else {
    }
    %c8_i32 = arith.constant 8 : i32
    %8 = arith.muli %arg1, %c8_i32 : i32
    %9 = tpu.assume_multiple %8, 8 : i32
    %c8_i32_4 = arith.constant 8 : i32
    %10 = arith.muli %arg2, %c8_i32_4 : i32
    %11 = tpu.assume_multiple %10, 8 : i32
    %c7_i32 = arith.constant 7 : i32
    %12 = arith.addi %9, %c7_i32 : i32
    %13 = arith.cmpi sle, %11, %12 : i32
    %14 = arith.extui %13 : i1 to i32
    %c0_i32_5 = arith.constant 0 : i32
    %15 = arith.cmpi ne, %14, %c0_i32_5 : i32
    scf.if %15 {
      %c0 = arith.constant 0 : index
      %19 = arith.index_cast %9 : i32 to index
      %c0_8 = arith.constant 0 : index
      %20 = vector.load %arg13[%c0, %19, %c0_8] : memref<4x8x8xbf16, #tpu.memory_space<vmem>>, vector<4x8x8xbf16>
      %c0_9 = arith.constant 0 : index
      %21 = arith.index_cast %11 : i32 to index
      %c0_10 = arith.constant 0 : index
      %22 = vector.load %arg14[%c0_9, %21, %c0_10] : memref<4x8x8xbf16, #tpu.memory_space<vmem>>, vector<4x8x8xbf16>
      %c0_11 = arith.constant 0 : index
      %23 = arith.index_cast %11 : i32 to index
      %c0_12 = arith.constant 0 : index
      %24 = vector.load %arg15[%c0_11, %23, %c0_12] : memref<4x8x8xbf16, #tpu.memory_space<vmem>>, vector<4x8x8xbf16>
      "tpu.trace_start"() <{level = 10 : i32, message = "hqd,hkd->hqk"}> : () -> ()
      %cst = arith.constant dense<0.000000e+00> : vector<4x8x8xf32>
      %25 = tpu.matmul %20, %22, %cst {dimension_numbers = #tpu.dot_dimension_numbers<[2], [2], [1], [1], [0, 0, 0, 1, 1, 1], [0], [0]>} : vector<4x8x8xbf16>, vector<4x8x8xbf16>, vector<4x8x8xf32> -> vector<4x8x8xf32>
      "tpu.trace_stop"() : () -> ()
      %26 = tpu.iota {dimensions = array<i32: 0>} : vector<8x8xi32>
      %27 = vector.broadcast %9 : i32 to vector<8x8xi32>
      %28 = arith.addi %27, %26 : vector<8x8xi32>
      %29 = tpu.iota {dimensions = array<i32: 1>} : vector<8x8xi32>
      %30 = vector.broadcast %11 : i32 to vector<8x8xi32>
      %31 = arith.addi %30, %29 : vector<8x8xi32>
      %32 = arith.cmpi sge, %28, %31 : vector<8x8xi32>
      %cst_13 = arith.constant 0.000000e+00 : f32
      %cst_14 = arith.constant -1.000000e+30 : f32
      %33 = vector.broadcast %cst_13 : f32 to vector<8x8xf32>
      %34 = vector.broadcast %cst_14 : f32 to vector<8x8xf32>
      %35 = arith.select %32, %33, %34 : vector<8x8xi1>, vector<8x8xf32>
      %36 = vector.shape_cast %35 : vector<8x8xf32> to vector<1x8x8xf32>
      %37 = vector.broadcast %36 : vector<1x8x8xf32> to vector<4x8x8xf32>
      %38 = arith.addf %25, %37 : vector<4x8x8xf32>
      %c0_15 = arith.constant 0 : index
      %c0_16 = arith.constant 0 : index
      %c0_17 = arith.constant 0 : index
      %39 = vector.load %arg16[%c0_15, %c0_16, %c0_17] : memref<4x8x1xf32, #tpu.memory_space<vmem>>, vector<4x8x1xf32>
      %cst_18 = arith.constant dense<0xFF800000> : vector<4x8xf32>
      %40 = vector.multi_reduction <maximumf>, %38, %cst_18 [2] : vector<4x8x8xf32> to vector<4x8xf32>
      %41 = vector.shape_cast %40 : vector<4x8xf32> to vector<4x8x1xf32>
      %42 = arith.maximumf %39, %41 : vector<4x8x1xf32>
      %43 = arith.subf %39, %42 : vector<4x8x1xf32>
      %44 = math.exp %43 : vector<4x8x1xf32>
      %45 = vector.broadcast %42 : vector<4x8x1xf32> to vector<4x8x8xf32>
      %46 = arith.subf %38, %45 : vector<4x8x8xf32>
      %47 = math.exp %46 : vector<4x8x8xf32>
      %c0_19 = arith.constant 0 : index
      %c0_20 = arith.constant 0 : index
      %c0_21 = arith.constant 0 : index
      %48 = vector.load %arg17[%c0_19, %c0_20, %c0_21] : memref<4x8x1xf32, #tpu.memory_space<vmem>>, vector<4x8x1xf32>
      %49 = arith.mulf %44, %48 : vector<4x8x1xf32>
      %cst_22 = arith.constant dense<0.000000e+00> : vector<4x8xf32>
      %50 = vector.multi_reduction <add>, %47, %cst_22 [2] : vector<4x8x8xf32> to vector<4x8xf32>
      %51 = vector.shape_cast %50 : vector<4x8xf32> to vector<4x8x1xf32>
      %52 = arith.addf %49, %51 : vector<4x8x1xf32>
      %c0_23 = arith.constant 0 : index
      %c0_24 = arith.constant 0 : index
      %c0_25 = arith.constant 0 : index
      %53 = vector.load %arg17[%c0_23, %c0_24, %c0_25] : memref<4x8x1xf32, #tpu.memory_space<vmem>>, vector<4x8x1xf32>
      tpu.vector_store %arg17[%c0_23, %c0_24, %c0_25], %52 {strides = array<i32>} : memref<4x8x1xf32, #tpu.memory_space<vmem>>, vector<4x8x1xf32>,
      %c0_26 = arith.constant 0 : index
      %c0_27 = arith.constant 0 : index
      %c0_28 = arith.constant 0 : index
      %54 = vector.load %arg18[%c0_26, %c0_27, %c0_28] : memref<4x8x8xf32, #tpu.memory_space<vmem>>, vector<4x8x8xf32>
      %55 = vector.broadcast %44 : vector<4x8x1xf32> to vector<4x8x8xf32>
      %56 = arith.mulf %55, %54 : vector<4x8x8xf32>
      %57 = arith.truncf %47 : vector<4x8x8xf32> to vector<4x8x8xbf16>
      "tpu.trace_start"() <{level = 10 : i32, message = "hqk,hkd->hqd"}> : () -> ()
      %cst_29 = arith.constant dense<0.000000e+00> : vector<4x8x8xf32>
      %58 = tpu.matmul %57, %24, %cst_29 {dimension_numbers = #tpu.dot_dimension_numbers<[2], [1], [1], [2], [0, 0, 0, 1, 1, 2], [0], [0]>} : vector<4x8x8xbf16>, vector<4x8x8xbf16>, vector<4x8x8xf32> -> vector<4x8x8xf32>
      "tpu.trace_stop"() : () -> ()
      %59 = arith.addf %56, %58 : vector<4x8x8xf32>
      %c0_30 = arith.constant 0 : index
      %c0_31 = arith.constant 0 : index
      %c0_32 = arith.constant 0 : index
      %60 = vector.load %arg18[%c0_30, %c0_31, %c0_32] : memref<4x8x8xf32, #tpu.memory_space<vmem>>, vector<4x8x8xf32>
      tpu.vector_store %arg18[%c0_30, %c0_31, %c0_32], %59 {strides = array<i32>} : memref<4x8x8xf32, #tpu.memory_space<vmem>>, vector<4x8x8xf32>,
      %c0_33 = arith.constant 0 : index
      %c0_34 = arith.constant 0 : index
      %c0_35 = arith.constant 0 : index
      %61 = vector.load %arg16[%c0_33, %c0_34, %c0_35] : memref<4x8x1xf32, #tpu.memory_space<vmem>>, vector<4x8x1xf32>
      tpu.vector_store %arg16[%c0_33, %c0_34, %c0_35], %42 {strides = array<i32>} : memref<4x8x1xf32, #tpu.memory_space<vmem>>, vector<4x8x1xf32>,
    } else {
    }
    %c0_i32_6 = arith.constant 0 : i32
    %16 = arith.cmpi eq, %arg2, %c0_i32_6 : i32
    %17 = arith.extui %16 : i1 to i32
    %c0_i32_7 = arith.constant 0 : i32
    %18 = arith.cmpi ne, %17, %c0_i32_7 : i32
    scf.if %18 {
      %c0 = arith.constant 0 : index
      %c0_8 = arith.constant 0 : index
      %c0_9 = arith.constant 0 : index
      %19 = vector.load %arg18[%c0, %c0_8, %c0_9] : memref<4x8x8xf32, #tpu.memory_space<vmem>>, vector<4x8x8xf32>
      %c0_10 = arith.constant 0 : index
      %c0_11 = arith.constant 0 : index
      %c0_12 = arith.constant 0 : index
      %20 = vector.load %arg17[%c0_10, %c0_11, %c0_12] : memref<4x8x1xf32, #tpu.memory_space<vmem>>, vector<4x8x1xf32>
      %21 = tpu.reciprocal %20 {approx = true} : vector<4x8x1xf32> -> vector<4x8x1xf32>
      %22 = vector.broadcast %21 : vector<4x8x1xf32> to vector<4x8x8xf32>
      %23 = arith.mulf %19, %22 : vector<4x8x8xf32>
      %24 = tpu.transpose %23, [1, 0, 2] : vector<4x8x8xf32> -> vector<8x4x8xf32>
      %25 = vector.shape_cast %24 : vector<8x4x8xf32> to vector<8x32xf32>
      %26 = arith.truncf %25 : vector<8x32xf32> to vector<8x32xbf16>
      %c0_13 = arith.constant 0 : index
      %c0_14 = arith.constant 0 : index
      %27 = vector.load %arg10[%c0_13, %c0_14] : memref<32x32xbf16, #tpu.memory_space<vmem>>, vector<32x32xbf16>
      %cst = arith.constant dense<0.000000e+00> : vector<8x32xf32>
      %28 = tpu.matmul %26, %27, %cst {dimension_numbers = #tpu.dot_dimension_numbers<[1], [0], [0], [1], [0, 0, 1, 1], [], []>} : vector<8x32xbf16>, vector<32x32xbf16>, vector<8x32xf32> -> vector<8x32xf32>
      %c0_15 = arith.constant 0 : index
      %c0_16 = arith.constant 0 : index
      %29 = vector.load %arg11[%c0_15, %c0_16] : memref<1x32xf32, #tpu.memory_space<vmem>>, vector<1x32xf32>
      %30 = vector.broadcast %29 : vector<1x32xf32> to vector<8x32xf32>
      %31 = arith.addf %28, %30 : vector<8x32xf32>
      %32 = vector.shape_cast %31 : vector<8x32xf32> to vector<1x8x32xf32>
      %c0_17 = arith.constant 0 : index
      %c0_18 = arith.constant 0 : index
      %c0_19 = arith.constant 0 : index
      %33 = vector.load %arg12[%c0_17, %c0_18, %c0_19] : memref<1x8x32xf32, #tpu.memory_space<vmem>>, vector<1x8x32xf32>
      tpu.vector_store %arg12[%c0_17, %c0_18, %c0_19], %32 {strides = array<i32>} : memref<1x8x32xf32, #tpu.memory_space<vmem>>, vector<1x8x32xf32>,
    } else {
    }
    return
  }
  func.func @transform_0(%arg0: i32, %arg1: i32, %arg2: i32) -> (i32, i32, i32) {
    %c0_i32 = arith.constant 0 : i32
    %c0_i32_0 = arith.constant 0 : i32
    %c0_i32_1 = arith.constant 0 : i32
    return %arg0, %c0_i32, %c0_i32_0 : i32, i32, i32
  }
  func.func @transform_1(%arg0: i32, %arg1: i32, %arg2: i32) -> (i32, i32) {
    %c0_i32 = arith.constant 0 : i32
    %c0_i32_0 = arith.constant 0 : i32
    %c0_i32_1 = arith.constant 0 : i32
    return %c0_i32, %c0_i32_0 : i32, i32
  }
  func.func @transform_2(%arg0: i32, %arg1: i32, %arg2: i32) -> (i32, i32) {
    %c0_i32 = arith.constant 0 : i32
    %c0_i32_0 = arith.constant 0 : i32
    %c0_i32_1 = arith.constant 0 : i32
    return %c0_i32, %c0_i32_0 : i32, i32
  }
  func.func @transform_3(%arg0: i32, %arg1: i32, %arg2: i32) -> (i32, i32) {
    %c0_i32 = arith.constant 0 : i32
    %c0_i32_0 = arith.constant 0 : i32
    %c0_i32_1 = arith.constant 0 : i32
    return %c0_i32, %c0_i32_0 : i32, i32
  }
  func.func @transform_4(%arg0: i32, %arg1: i32, %arg2: i32) -> (i32, i32) {
    %c0_i32 = arith.constant 0 : i32
    %c0_i32_0 = arith.constant 0 : i32
    %c0_i32_1 = arith.constant 0 : i32
    return %c0_i32, %c0_i32_0 : i32, i32
  }
  func.func @transform_5(%arg0: i32, %arg1: i32, %arg2: i32) -> (i32, i32) {
    %c0_i32 = arith.constant 0 : i32
    %c0_i32_0 = arith.constant 0 : i32
    %c0_i32_1 = arith.constant 0 : i32
    return %c0_i32, %c0_i32_0 : i32, i32
  }
  func.func @transform_6(%arg0: i32, %arg1: i32, %arg2: i32) -> (i32, i32) {
    %c0_i32 = arith.constant 0 : i32
    %c0_i32_0 = arith.constant 0 : i32
    %c0_i32_1 = arith.constant 0 : i32
    return %c0_i32, %c0_i32_0 : i32, i32
  }
  func.func @transform_7(%arg0: i32, %arg1: i32, %arg2: i32) -> (i32, i32) {
    %c0_i32 = arith.constant 0 : i32
    %c0_i32_0 = arith.constant 0 : i32
    %c0_i32_1 = arith.constant 0 : i32
    return %c0_i32, %c0_i32_0 : i32, i32
  }
  func.func @transform_8(%arg0: i32, %arg1: i32, %arg2: i32) -> (i32, i32) {
    %c0_i32 = arith.constant 0 : i32
    %c0_i32_0 = arith.constant 0 : i32
    %c0_i32_1 = arith.constant 0 : i32
    return %c0_i32, %c0_i32_0 : i32, i32
  }
  func.func @transform_9(%arg0: i32, %arg1: i32, %arg2: i32) -> (i32, i32, i32) {
    %c0_i32 = arith.constant 0 : i32
    %c0_i32_0 = arith.constant 0 : i32
    return %arg0, %arg1, %c0_i32 : i32, i32, i32
  }
}

</mosaic_0001>

<llo_original>
// kernel: tpu_custom_call.1
$region0: #{tpu_custom_call.1}
  #allocation0 [shape = 'u32[]', space=smem, size = 0x4, offset = 0x4, fixed_abs, tag = 'smem constant byte address 0x4 - core index']
  #allocation1 [shape = 'u32[72,128]{1,0:T(1,128)}', space=vmem, size = 0x9000, scoped, tag = 'internal scratch']
  #allocation2 [shape = 'bf16[4,8,8]{2,1,0:T(8,128)(2,1)}', space=vmem, size = 0x2000, scoped, tag = 'scratch operand']
  #allocation3 [shape = 'bf16[4,8,8]{2,1,0:T(8,128)(2,1)}', space=vmem, size = 0x2000, scoped, tag = 'scratch operand']
  #allocation4 [shape = 'bf16[4,8,8]{2,1,0:T(8,128)(2,1)}', space=vmem, size = 0x2000, scoped, tag = 'scratch operand']
  #allocation5 [shape = 'f32[4,8,1]{2,1,0:T(8,128)}', space=vmem, size = 0x4000, scoped, tag = 'scratch operand']
  #allocation6 [shape = 'f32[4,8,1]{2,1,0:T(8,128)}', space=vmem, size = 0x4000, scoped, tag = 'scratch operand']
  #allocation7 [shape = 'f32[4,8,8]{2,1,0:T(8,128)}', space=vmem, size = 0x4000, scoped, tag = 'scratch operand']
  %s0 = inlined_call_operand.hbm [shape: f32[2,8,32], index: 0, kind: input, shape index: {}]
  %s1 = inlined_call_operand.hbm [shape: f32[8,32], index: 1, kind: input, shape index: {}]
  %s2 = inlined_call_operand.hbm [shape: f32[8,32], index: 2, kind: input, shape index: {}]
  %s3 = inlined_call_operand.vmem [shape: f32[1,32], index: 3, kind: input, shape index: {}]
  %s4 = inlined_call_operand.vmem [shape: f32[1,32], index: 4, kind: input, shape index: {}]
  %s5 = inlined_call_operand.hbm [shape: bf16[32,96], index: 5, kind: input, shape index: {}]
  %s6 = inlined_call_operand.vmem [shape: f32[1,96], index: 6, kind: input, shape index: {}]
  %s7 = inlined_call_operand.hbm [shape: bf16[32,32], index: 7, kind: input, shape index: {}]
  %s8 = inlined_call_operand.vmem [shape: f32[1,32], index: 8, kind: input, shape index: {}]
  %s9 = inlined_call_operand.hbm [shape: f32[2,8,32], index: 9, kind: output, shape index: {}]
  %s10 = sld [smem:[#allocation0]]
  $region105: #{tpu_custom_call.1} parent=0
    _
  %s12 = ssub.s32 1, %s10
  %s13 = scalar_select 0, %s12, %s10
  $region1: #{tpu_custom_call.1} parent=0
    #allocation8 [shape = 'u8[8192]{0}', space=vmem, size = 0x2000, scoped, tag = 'input window, operand 0']
    #allocation9 [shape = 's32[2]{0}', space=sflag, size = 0x8, scoped, tag = 'scoped memory for tpu_custom_call.1']
    #allocation10 [shape = 's32[2]{0}', space=sflag, size = 0x8, scoped, tag = 'scoped memory for tpu_custom_call.1']
    #allocation11 [shape = 'u8[4096]{0}', space=vmem, size = 0x1000, scoped, tag = 'input window, operand 1, single buffered']
    #allocation12 [shape = 's32[1]{0}', space=sflag, size = 0x4, scoped, tag = 'scoped memory for tpu_custom_call.1']
    #allocation13 [shape = 'u8[4096]{0}', space=vmem, size = 0x1000, scoped, tag = 'input window, operand 2, single buffered']
    #allocation14 [shape = 'u8[8192]{0}', space=vmem, size = 0x2000, scoped, tag = 'input window, operand 5, single buffered']
    #allocation15 [shape = 's32[1]{0}', space=sflag, size = 0x4, scoped, tag = 'scoped memory for tpu_custom_call.1']
    #allocation16 [shape = 'u8[8192]{0}', space=vmem, size = 0x2000, scoped, tag = 'input window, operand 7, single buffered']
    #allocation17 [shape = 'u8[8192]{0}', space=vmem, size = 0x2000, scoped, tag = 'output window, operand 0']
    %14 = vsyncpa [#allocation9], 0
    %s15 = scalar_lea.sflag [#allocation9], 1
    %16 = vsyncpa %s15, 0
    %17 = vsyncpa [#allocation12], 0
    %18 = vsyncpa [#allocation15], 0
    %19 = vsyncpa [#allocation10], 0
    %s20 = scalar_lea.sflag [#allocation10], 1
    %21 = vsyncpa %s20, 0
    loop: start=0, step=1, limit=4
    $region2: #{tpu_custom_call.1} parent=1 // loop_pre_header
      _
    $region3: #{tpu_custom_call.1} parent=1 // loop_header
      %s23 = sphi 0, %s27
      %p24 = scmp.ge.s32.totalorder %s23, 4
      %s30 = sphi 0, %s49
      %s31 = sphi 0, %s45
      %s32 = sphi 0, %s41
      %s33 = sphi 0, %s30
      %s34 = sphi 0, %s31
      %s35 = sphi 0, %s32
      %s36 = sphi 0, %s33
      %s37 = sphi 0, %s34
      %s38 = sphi 0, %s35
      %s52 = sphi 0, %s54
      %s55 = sphi 0, %s52
      %s56 = sphi 0, %s55
      %s72 = sphi 0, %s56
      %s76 = sphi 0, %s76
      %s78 = sphi 0, %s76
      %s79 = sphi 0, %s78
      %s93 = sphi 0, %s79
      %s97 = sphi 0, %s97
      %s99 = sphi 0, %s97
      %s100 = sphi 0, %s99
      %s114 = sphi 0, %s100
      %s118 = sphi 0, %s118
      %s120 = sphi 0, %s118
      %s121 = sphi 0, %s120
      %s135 = sphi 0, %s121
      %s139 = sphi 0, %s139
      %s141 = sphi 0, %s139
      %s142 = sphi 0, %s141
      %s156 = sphi 0, %s142
      %s160 = sphi 0, %s160
      %s162 = sphi 0, %s160
      %s163 = sphi 0, %s162
      %s177 = sphi 0, %s163
      %s181 = sphi 0, %s181
      %s183 = sphi 0, %s181
      %s184 = sphi 0, %s183
      %s198 = sphi 0, %s184
      %s202 = sphi 0, %s202
      %s204 = sphi 0, %s202
      %s205 = sphi 0, %s204
      %s219 = sphi 0, %s205
      %s223 = sphi 0, %s223
      %s225 = sphi 0, %s223
      %s226 = sphi 0, %s225
      %s240 = sphi 0, %s226
      %s248 = sphi 0, %s250
      %s251 = sphi 0, %s248
      %s252 = sphi 0, %s251
      %s268 = sphi 0, %s252
    $region4: #{tpu_custom_call.1} parent=1 // loop_header_branch
      %26 = sbr.rel (%p24) target = $region8
    $region5: #{tpu_custom_call.1} parent=1 // loop_body
      %s28 = ssub.s32 %s23, 1
      %s29 = ssub.s32 %s23, 2
      %s39 = sadd.s32 1, %s32
      %p40 = scmp.ge.s32.totalorder %s39, 1
      %s41 = scalar_select %p40, 0, %s39
      %s42 = sadd.s32 1, %s31
      %s43 = scalar_select %p40, %s42, %s31
      %p44 = scmp.ge.s32.totalorder %s43, 1
      %s45 = scalar_select %p44, 0, %s43
      %s46 = sadd.s32 1, %s30
      %s47 = scalar_select %p44, %s46, %s30
      %p48 = scmp.ge.s32.totalorder %s47, 2
      %s49 = scalar_select %p48, 0, %s47
      %s50 = ssub.s32 %s30, %s49
      %p51 = scmp.eq.s32.totalorder %s50, 0
      %s53 = sadd.s32 %s52, 1
      %s54 = scalar_select %p51, %s52, %s53
      %p57 = pneg %p51
      %p58 = scmp.eq.s32.totalorder %s23, 1
      %p59 = por %p57, %p58
      %p60 = scmp.ne.s32.totalorder %s52, %s55
      %p61 = scmp.eq.s32.totalorder %s23, 0
      %p62 = por %p60, %p61
      %p63 = scmp.ne.s32.totalorder %s52, %s55
      %p64 = scmp.eq.s32.totalorder %s28, 1
      %p65 = por %p63, %p64
      %p66 = scmp.ne.s32.totalorder %s55, %s56
      %p67 = scmp.eq.s32.totalorder %s28, 0
      %p68 = por %p66, %p67
      %p69 = scmp.ne.s32.totalorder %s55, %s56
      %p70 = scmp.eq.s32.totalorder %s29, 1
      %p71 = por %p69, %p70
      %p73 = scmp.ne.s32.totalorder %s56, %s72
      %p74 = scmp.eq.s32.totalorder %s29, 0
      %p75 = por %p73, %p74
      %s77 = sadd.s32 %s76, 1
      %p80 = scmp.eq.s32.totalorder %s23, 1
      %p81 = scmp.ne.s32.totalorder %s76, %s78
      %p82 = scmp.eq.s32.totalorder %s23, 0
      %p83 = por %p81, %p82
      %p84 = scmp.ne.s32.totalorder %s76, %s78
      %p85 = scmp.eq.s32.totalorder %s28, 1
      %p86 = por %p84, %p85
      %p87 = scmp.ne.s32.totalorder %s78, %s79
      %p88 = scmp.eq.s32.totalorder %s28, 0
      %p89 = por %p87, %p88
      %p90 = scmp.ne.s32.totalorder %s78, %s79
      %p91 = scmp.eq.s32.totalorder %s29, 1
      %p92 = por %p90, %p91
      %p94 = scmp.ne.s32.totalorder %s79, %s93
      %p95 = scmp.eq.s32.totalorder %s29, 0
      %p96 = por %p94, %p95
      %s98 = sadd.s32 %s97, 1
      %p101 = scmp.eq.s32.totalorder %s23, 1
      %p102 = scmp.ne.s32.totalorder %s97, %s99
      %p103 = scmp.eq.s32.totalorder %s23, 0
      %p104 = por %p102, %p103
      %p105 = scmp.ne.s32.totalorder %s97, %s99
      %p106 = scmp.eq.s32.totalorder %s28, 1
      %p107 = por %p105, %p106
      %p108 = scmp.ne.s32.totalorder %s99, %s100
      %p109 = scmp.eq.s32.totalorder %s28, 0
      %p110 = por %p108, %p109
      %p111 = scmp.ne.s32.totalorder %s99, %s100
      %p112 = scmp.eq.s32.totalorder %s29, 1
      %p113 = por %p111, %p112
      %p115 = scmp.ne.s32.totalorder %s100, %s114
      %p116 = scmp.eq.s32.totalorder %s29, 0
      %p117 = por %p115, %p116
      %s119 = sadd.s32 %s118, 1
      %p122 = scmp.eq.s32.totalorder %s23, 1
      %p123 = scmp.ne.s32.totalorder %s118, %s120
      %p124 = scmp.eq.s32.totalorder %s23, 0
      %p125 = por %p123, %p124
      %p126 = scmp.ne.s32.totalorder %s118, %s120
      %p127 = scmp.eq.s32.totalorder %s28, 1
      %p128 = por %p126, %p127
      %p129 = scmp.ne.s32.totalorder %s120, %s121
      %p130 = scmp.eq.s32.totalorder %s28, 0
      %p131 = por %p129, %p130
      %p132 = scmp.ne.s32.totalorder %s120, %s121
      %p133 = scmp.eq.s32.totalorder %s29, 1
      %p134 = por %p132, %p133
      %p136 = scmp.ne.s32.totalorder %s121, %s135
      %p137 = scmp.eq.s32.totalorder %s29, 0
      %p138 = por %p136, %p137
      %s140 = sadd.s32 %s139, 1
      %p143 = scmp.eq.s32.totalorder %s23, 1
      %p144 = scmp.ne.s32.totalorder %s139, %s141
      %p145 = scmp.eq.s32.totalorder %s23, 0
      %p146 = por %p144, %p145
      %p147 = scmp.ne.s32.totalorder %s139, %s141
      %p148 = scmp.eq.s32.totalorder %s28, 1
      %p149 = por %p147, %p148
      %p150 = scmp.ne.s32.totalorder %s141, %s142
      %p151 = scmp.eq.s32.totalorder %s28, 0
      %p152 = por %p150, %p151
      %p153 = scmp.ne.s32.totalorder %s141, %s142
      %p154 = scmp.eq.s32.totalorder %s29, 1
      %p155 = por %p153, %p154
      %p157 = scmp.ne.s32.totalorder %s142, %s156
      %p158 = scmp.eq.s32.totalorder %s29, 0
      %p159 = por %p157, %p158
      %s161 = sadd.s32 %s160, 1
      %p164 = scmp.eq.s32.totalorder %s23, 1
      %p165 = scmp.ne.s32.totalorder %s160, %s162
      %p166 = scmp.eq.s32.totalorder %s23, 0
      %p167 = por %p165, %p166
      %p168 = scmp.ne.s32.totalorder %s160, %s162
      %p169 = scmp.eq.s32.totalorder %s28, 1
      %p170 = por %p168, %p169
      %p171 = scmp.ne.s32.totalorder %s162, %s163
      %p172 = scmp.eq.s32.totalorder %s28, 0
      %p173 = por %p171, %p172
      %p174 = scmp.ne.s32.totalorder %s162, %s163
      %p175 = scmp.eq.s32.totalorder %s29, 1
      %p176 = por %p174, %p175
      %p178 = scmp.ne.s32.totalorder %s163, %s177
      %p179 = scmp.eq.s32.totalorder %s29, 0
      %p180 = por %p178, %p179
      %s182 = sadd.s32 %s181, 1
      %p185 = scmp.eq.s32.totalorder %s23, 1
      %p186 = scmp.ne.s32.totalorder %s181, %s183
      %p187 = scmp.eq.s32.totalorder %s23, 0
      %p188 = por %p186, %p187
      %p189 = scmp.ne.s32.totalorder %s181, %s183
      %p190 = scmp.eq.s32.totalorder %s28, 1
      %p191 = por %p189, %p190
      %p192 = scmp.ne.s32.totalorder %s183, %s184
      %p193 = scmp.eq.s32.totalorder %s28, 0
      %p194 = por %p192, %p193
      %p195 = scmp.ne.s32.totalorder %s183, %s184
      %p196 = scmp.eq.s32.totalorder %s29, 1
      %p197 = por %p195, %p196
      %p199 = scmp.ne.s32.totalorder %s184, %s198
      %p200 = scmp.eq.s32.totalorder %s29, 0
      %p201 = por %p199, %p200
      %s203 = sadd.s32 %s202, 1
      %p206 = scmp.eq.s32.totalorder %s23, 1
      %p207 = scmp.ne.s32.totalorder %s202, %s204
      %p208 = scmp.eq.s32.totalorder %s23, 0
      %p209 = por %p207, %p208
      %p210 = scmp.ne.s32.totalorder %s202, %s204
      %p211 = scmp.eq.s32.totalorder %s28, 1
      %p212 = por %p210, %p211
      %p213 = scmp.ne.s32.totalorder %s204, %s205
      %p214 = scmp.eq.s32.totalorder %s28, 0
      %p215 = por %p213, %p214
      %p216 = scmp.ne.s32.totalorder %s204, %s205
      %p217 = scmp.eq.s32.totalorder %s29, 1
      %p218 = por %p216, %p217
      %p220 = scmp.ne.s32.totalorder %s205, %s219
      %p221 = scmp.eq.s32.totalorder %s29, 0
      %p222 = por %p220, %p221
      %s224 = sadd.s32 %s223, 1
      %p227 = scmp.eq.s32.totalorder %s23, 1
      %p228 = scmp.ne.s32.totalorder %s223, %s225
      %p229 = scmp.eq.s32.totalorder %s23, 0
      %p230 = por %p228, %p229
      %p231 = scmp.ne.s32.totalorder %s223, %s225
      %p232 = scmp.eq.s32.totalorder %s28, 1
      %p233 = por %p231, %p232
      %p234 = scmp.ne.s32.totalorder %s225, %s226
      %p235 = scmp.eq.s32.totalorder %s28, 0
      %p236 = por %p234, %p235
      %p237 = scmp.ne.s32.totalorder %s225, %s226
      %p238 = scmp.eq.s32.totalorder %s29, 1
      %p239 = por %p237, %p238
      %p241 = scmp.ne.s32.totalorder %s226, %s240
      %p242 = scmp.eq.s32.totalorder %s29, 0
      %p243 = por %p241, %p242
      %s244 = ssub.s32 %s30, %s49
      %s245 = ssub.s32 %s31, %s45
      %s246 = sor.u32 %s244, %s245
      %p247 = scmp.eq.s32.totalorder %s246, 0
      %s249 = sadd.s32 %s248, 1
      %s250 = scalar_select %p247, %s248, %s249
      %p253 = pneg %p247
      %p254 = scmp.eq.s32.totalorder %s23, 1
      %p255 = por %p253, %p254
      %p256 = scmp.ne.s32.totalorder %s248, %s251
      %p257 = scmp.eq.s32.totalorder %s23, 0
      %p258 = por %p256, %p257
      %p259 = scmp.ne.s32.totalorder %s248, %s251
      %p260 = scmp.eq.s32.totalorder %s28, 1
      %p261 = por %p259, %p260
      %p262 = scmp.ne.s32.totalorder %s251, %s252
      %p263 = scmp.eq.s32.totalorder %s28, 0
      %p264 = por %p262, %p263
      %p265 = scmp.ne.s32.totalorder %s251, %s252
      %p266 = scmp.eq.s32.totalorder %s29, 1
      %p267 = por %p265, %p266
      %p269 = scmp.ne.s32.totalorder %s252, %s268
      %p270 = scmp.eq.s32.totalorder %s29, 0
      %p271 = por %p269, %p270
      %p272 = scmp.le.s32.totalorder 1, %s23
      %p273 = scmp.lt.s32.totalorder %s23, 3
      %p274 = pnand %p272, %p273
      %p275 = pneg %p274
      // Predicated region
      $region9: #{tpu_custom_call.1} parent=5 // pred_check
        _
      $region10: #{tpu_custom_call.1} parent=5 // pred_check_branch
        %277 = sbr.rel (%p274) target = $region12
      $region11: #{tpu_custom_call.1} parent=5 // pred_region
        %s278 = ssub.s32 %s23, 1
        // Predicated region
        $region13: #{tpu_custom_call.1} parent=11 // pred_check
          %p279 = pneg %p89
        $region14: #{tpu_custom_call.1} parent=11 // pred_check_branch
          %281 = sbr.rel (%p279) target = $region16
        $region15: #{tpu_custom_call.1} parent=11 // pred_region
          %283 = vsyncadd [#allocation12], 0
          %s285 = sshll.u32 %s1, 4
          %s286 = int_to_ptr.hbm [resolvable:$true] %s285
          %s287 = sshll.u32 [#allocation11], 4
          %s288 = int_to_ptr.vmem [resolvable:$true] %s287
          %290 = dma.hbm_to_vmem [thread:$0]  %s286, 128, %s288, [#allocation12]
        $region16: #{tpu_custom_call.1} parent=11 // pred_fallthru
          _
        // Predicated region
        $region17: #{tpu_custom_call.1} parent=11 // pred_check
          %p291 = pneg %p110
        $region18: #{tpu_custom_call.1} parent=11 // pred_check_branch
          %293 = sbr.rel (%p291) target = $region20
        $region19: #{tpu_custom_call.1} parent=11 // pred_region
          %295 = vsyncadd [#allocation12], 0
          %s297 = sshll.u32 %s2, 4
          %s298 = int_to_ptr.hbm [resolvable:$true] %s297
          %s299 = sshll.u32 [#allocation13], 4
          %s300 = int_to_ptr.vmem [resolvable:$true] %s299
          %302 = dma.hbm_to_vmem [thread:$0]  %s298, 128, %s300, [#allocation12]
        $region20: #{tpu_custom_call.1} parent=11 // pred_fallthru
          _
        // Predicated region
        $region21: #{tpu_custom_call.1} parent=11 // pred_check
          %p303 = pneg %p131
        $region22: #{tpu_custom_call.1} parent=11 // pred_check_branch
          %305 = sbr.rel (%p303) target = $region24
        $region23: #{tpu_custom_call.1} parent=11 // pred_region
          _
        $region24: #{tpu_custom_call.1} parent=11 // pred_fallthru
          _
        // Predicated region
        $region25: #{tpu_custom_call.1} parent=11 // pred_check
          %p306 = pneg %p152
        $region26: #{tpu_custom_call.1} parent=11 // pred_check_branch
          %308 = sbr.rel (%p306) target = $region28
        $region27: #{tpu_custom_call.1} parent=11 // pred_region
          _
        $region28: #{tpu_custom_call.1} parent=11 // pred_fallthru
          _
        // Predicated region
        $region29: #{tpu_custom_call.1} parent=11 // pred_check
          %p309 = pneg %p173
        $region30: #{tpu_custom_call.1} parent=11 // pred_check_branch
          %311 = sbr.rel (%p309) target = $region32
        $region31: #{tpu_custom_call.1} parent=11 // pred_region
          %313 = vsyncadd [#allocation15], 0
          %s314 = sshll.u32 %s5, 4
          %s315 = int_to_ptr.hbm [resolvable:$true] %s314
          %s316 = sshll.u32 [#allocation14], 4
          %s317 = int_to_ptr.vmem [resolvable:$true] %s316
          %322 = dma.hbm_to_vmem [thread:$0]  %s315, 256, %s317, [#allocation15], 64, 64, 4
        $region32: #{tpu_custom_call.1} parent=11 // pred_fallthru
          _
        // Predicated region
        $region33: #{tpu_custom_call.1} parent=11 // pred_check
          %p323 = pneg %p194
        $region34: #{tpu_custom_call.1} parent=11 // pred_check_branch
          %325 = sbr.rel (%p323) target = $region36
        $region35: #{tpu_custom_call.1} parent=11 // pred_region
          _
        $region36: #{tpu_custom_call.1} parent=11 // pred_fallthru
          _
        // Predicated region
        $region37: #{tpu_custom_call.1} parent=11 // pred_check
          %p326 = pneg %p215
        $region38: #{tpu_custom_call.1} parent=11 // pred_check_branch
          %328 = sbr.rel (%p326) target = $region40
        $region39: #{tpu_custom_call.1} parent=11 // pred_region
          %330 = vsyncadd [#allocation15], 0
          %s331 = sshll.u32 %s7, 4
          %s332 = int_to_ptr.hbm [resolvable:$true] %s331
          %s333 = sshll.u32 [#allocation16], 4
          %s334 = int_to_ptr.vmem [resolvable:$true] %s333
          %339 = dma.hbm_to_vmem [thread:$0]  %s332, 256, %s334, [#allocation15], 64, 64, 4
        $region40: #{tpu_custom_call.1} parent=11 // pred_fallthru
          _
        // Predicated region
        $region41: #{tpu_custom_call.1} parent=11 // pred_check
          %p340 = pneg %p236
        $region42: #{tpu_custom_call.1} parent=11 // pred_check_branch
          %342 = sbr.rel (%p340) target = $region44
        $region43: #{tpu_custom_call.1} parent=11 // pred_region
          _
        $region44: #{tpu_custom_call.1} parent=11 // pred_fallthru
          _
      $region12: #{tpu_custom_call.1} parent=5 // pred_fallthru
        _
      %p343 = scmp.lt.s32.totalorder %s23, 2
      // Predicated region
      $region45: #{tpu_custom_call.1} parent=5 // pred_check
        %p344 = pneg %p343
      $region46: #{tpu_custom_call.1} parent=5 // pred_check_branch
        %346 = sbr.rel (%p344) target = $region48
      $region47: #{tpu_custom_call.1} parent=5 // pred_region
        // Predicated region
        $region49: #{tpu_custom_call.1} parent=47 // pred_check
          %p347 = pneg %p62
        $region50: #{tpu_custom_call.1} parent=47 // pred_check_branch
          %349 = sbr.rel (%p347) target = $region52
        $region51: #{tpu_custom_call.1} parent=47 // pred_region
          %s350 = sand.u32 %s52, 1
          %s351 = scalar_lea.sflag [#allocation9], %s350
          %s352 = sand.u32 %s52, 1
          %s353 = smul.addr %s352, 8
          %s354 = scalar_lea.vmem [#allocation8], %s353
          %356 = vsyncadd %s351, 0
          %s357 = smul.addr %s30, 8
          %s358 = scalar_lea.hbm %s0, %s357
          %s360 = sshll.u32 %s358, 4
          %s361 = int_to_ptr.hbm [resolvable:$true] %s360
          %s362 = sshll.u32 %s354, 4
          %s363 = int_to_ptr.vmem [resolvable:$true] %s362
          %365 = dma.hbm_to_vmem [thread:$0]  %s361, 128, %s363, %s351
        $region52: #{tpu_custom_call.1} parent=47 // pred_fallthru
          _
      $region48: #{tpu_custom_call.1} parent=5 // pred_fallthru
        _
      %p366 = scmp.le.s32.totalorder 1, %s23
      %p367 = scmp.lt.s32.totalorder %s23, 3
      %p368 = pnand %p366, %p367
      %p369 = pneg %p368
      // Predicated region
      $region53: #{tpu_custom_call.1} parent=5 // pred_check
        _
      $region54: #{tpu_custom_call.1} parent=5 // pred_check_branch
        %371 = sbr.rel (%p368) target = $region56
      $region55: #{tpu_custom_call.1} parent=5 // pred_region
        %s372 = ssub.s32 %s23, 1
        %s373 = sand.u32 %s55, 1
        %s374 = scalar_lea.sflag [#allocation9], %s373
        %s375 = sand.u32 %s55, 1
        %s376 = smul.addr %s375, 8
        %s377 = scalar_lea.vmem [#allocation8], %s376
        // Predicated region
        $region57: #{tpu_custom_call.1} parent=55 // pred_check
          %p378 = pneg %p68
        $region58: #{tpu_custom_call.1} parent=55 // pred_check_branch
          %380 = sbr.rel (%p378) target = $region60
        $region59: #{tpu_custom_call.1} parent=55 // pred_region
          %382 = dma.done %s374, 128
        $region60: #{tpu_custom_call.1} parent=55 // pred_fallthru
          _
        // Predicated region
        $region61: #{tpu_custom_call.1} parent=55 // pred_check
          %p383 = pneg %p89
        $region62: #{tpu_custom_call.1} parent=55 // pred_check_branch
          %385 = sbr.rel (%p383) target = $region64
        $region63: #{tpu_custom_call.1} parent=55 // pred_region
          %387 = dma.done [#allocation12], 128
        $region64: #{tpu_custom_call.1} parent=55 // pred_fallthru
          _
        // Predicated region
        $region65: #{tpu_custom_call.1} parent=55 // pred_check
          %p388 = pneg %p110
        $region66: #{tpu_custom_call.1} parent=55 // pred_check_branch
          %390 = sbr.rel (%p388) target = $region68
        $region67: #{tpu_custom_call.1} parent=55 // pred_region
          %392 = dma.done [#allocation12], 128
        $region68: #{tpu_custom_call.1} parent=55 // pred_fallthru
          _
        // Predicated region
        $region69: #{tpu_custom_call.1} parent=55 // pred_check
          %p393 = pneg %p173
        $region70: #{tpu_custom_call.1} parent=55 // pred_check_branch
          %395 = sbr.rel (%p393) target = $region72
        $region71: #{tpu_custom_call.1} parent=55 // pred_region
          %397 = dma.done [#allocation15], 256
        $region72: #{tpu_custom_call.1} parent=55 // pred_fallthru
          _
        // Predicated region
        $region73: #{tpu_custom_call.1} parent=55 // pred_check
          %p398 = pneg %p215
        $region74: #{tpu_custom_call.1} parent=55 // pred_check_branch
          %400 = sbr.rel (%p398) target = $region76
        $region75: #{tpu_custom_call.1} parent=55 // pred_region
          %402 = dma.done [#allocation15], 256
        $region76: #{tpu_custom_call.1} parent=55 // pred_fallthru
          _
        %s403 = sand.u32 %s55, 1
        %s404 = scalar_lea.sflag [#allocation9], %s403
        %s405 = sand.u32 %s55, 1
        %s406 = smul.addr %s405, 8
        %s407 = scalar_lea.vmem [#allocation8], %s406
        %p408 = pneg %p68
        %p409 = pneg %p65
        %p410 = pneg %p89
        %p411 = pneg %p86
        %p412 = pneg %p110
        %p413 = pneg %p107
        %p414 = pneg %p131
        %p415 = pneg %p128
        %p416 = pneg %p152
        %p417 = pneg %p149
        %p418 = pneg %p173
        %p419 = pneg %p170
        %p420 = pneg %p194
        %p421 = pneg %p191
        %p422 = pneg %p215
        %p423 = pneg %p212
        %p424 = pneg %p236
        %p425 = pneg %p233
        %p426 = pneg %p264
        %p427 = pneg %p261
        %s428 = sand.u32 %s251, 1
        %s429 = scalar_lea.sflag [#allocation10], %s428
        %s430 = sand.u32 %s251, 1
        %s431 = smul.addr %s430, 8
        %s432 = scalar_lea.vmem [#allocation17], %s431
        %p434 = scmp.eq.s32.totalorder %s34, 0
        %p435 = scmp.eq.s32.totalorder %s35, 0
        %p436 = pnand %p434, %p435
        %p437 = pneg %p436
        // Predicated region
        $region77: #{tpu_custom_call.1} parent=55 // pred_check
          _
        $region78: #{tpu_custom_call.1} parent=55 // pred_check_branch
          %439 = sbr.rel (%p436) target = $region80
        $region79: #{tpu_custom_call.1} parent=55 // pred_region
          %v440 = vld [vmem:[%s377] sm:$0xff]
          %vm441 = vcmask 261120
          %v442 = vsel %vm441, %v440, 0.0
          %443 = vadd.xlane.f32.xlu0 %v442
          %v444 = vpop.xlane.xlu0 %443
          %v445 = vrcp.pop 32.0
          %v446 = vmul.f32 32.0, %v445
          %v447 = vsub.f32 1.0, %v446
          %v448 = vmul.f32 %v445, %v447
          %v449 = vadd.f32 %v445, %v448
          %vm450 = vweird.f32 %v445
          %v451 = vsel %vm450, %v445, %v449
          %v452 = vmul.f32 %v444, %v451
          %v453 = vsub.f32 %v440, %v452
          %v454 = vmul.f32 %v453, %v453
          %v455 = vsel %vm441, %v454, 0.0
          %456 = vadd.xlane.f32.xlu0 %v455
          %v457 = vpop.xlane.xlu0 %456
          %v458 = vmul.f32 %v457, %v451
          %v459 = vadd.f32 %v458, 1e-05
          %v460 = vrsqrt.pop %v459
          %v461 = vmul.f32 %v460, %v459
          %v462 = vmul.f32 %v461, %v460
          %v463 = vmul.f32 0.5, %v462
          %v464 = vsub.f32 1.5, %v463
          %v465 = vmul.f32 %v460, %v464
          %vm466 = vweird.f32 %v459
          %vm467 = vweird.f32 %v460
          %vm468 = vmor %vm466, %vm467
          %v469 = vsel %vm468, %v460, %v465
          %v470 = vmul.f32 %v453, %v469
          %v471 = vld [vmem:[%s3] sm:$0x1]
          %v473 = vperm.slane %v471, 0
          %v475 = vmul.f32 %v470, %v473
          %v476 = vld [vmem:[%s4] sm:$0x1]
          %v478 = vperm.slane %v476, 0
          %v480 = vadd.f32 %v475, %v478
          %v481 = vpack.c.bf16 %v480, %v480
          %v482 = vld [vmem:[#allocation14] sm:$0xf]
          %v483 = vld [vmem:[#allocation14 + $0x4] sm:$0xf]
          %v484 = vld [vmem:[#allocation14 + $0x8] sm:$0xf]
          %v485 = vld [vmem:[#allocation14 + $0xc] sm:$0xf]
          %v486 = vld [vmem:[%s6] sm:$0x1]
          %v488 = vperm.slane %v486, 0
          %v494 = vunpack.c.l.b16 %v482
          %v495 = vunpack.c.l.b16 %v483
          %v496 = vunpack.c.l.b16 %v484
          %v497 = vunpack.c.l.b16 %v485
          %v498 = vpack.c.b16 %v495, %v494
          %v499 = vpack.c.b16 %v497, %v496
          %v503 = vsel %vm441, %v481, 0
          %505 = vmatpush.bf16.msra.mxu0 0
          %506 = vmatpush.bf16.msra.mxu0 0
          %507 = vmatpush.bf16.msra.mxu0 0
          %508 = vmatpush.bf16.msra.mxu0 0
          %509 = vmatpush.bf16.msra.mxu0 0
          %510 = vmatpush.bf16.msra.mxu0 0
          %511 = vmatpush.bf16.msra.mxu0 %v499
          %512 = vmatpush.bf16.msra.mxu0 %v498
          %513 = vmatmul.bf16.gmra.mxu0 %v503
          %v514 = vpop.f32.mrf.mxu0
          %v515 = vadd.f32 %v488, %v514
          %v516 = vpop.f32.mrf.mxu0
          %517 = vdwg.mxu0
          %519 = vrot.lane.b32.xlu0 %v515, 112
          %v520 = vpop.permute.xlu0 %519
          %522 = vrot.lane.b32.xlu0 %v515, 16
          %v523 = vpop.permute.xlu0 %522
          %vm525 = vcmask 130048
          %v526 = vsel %vm525, %v520, %v523
          %v527 = vld [vmem:[#allocation11] sm:$0xff]
          %v528 = vmul.f32 %v515, %v527
          %v529 = vld [vmem:[#allocation13] sm:$0xff]
          %v530 = vmul.f32 %v526, %v529
          %v531 = vadd.f32 %v528, %v530
          %533 = vrot.lane.b32.xlu0 %v531, 124
          %v534 = vpop.permute.xlu0 %533
          %536 = vrot.lane.b32.xlu0 %v531, 120
          %v537 = vpop.permute.xlu0 %536
          %539 = vrot.lane.b32.xlu0 %v531, 116
          %v540 = vpop.permute.xlu0 %539
          %v542 = vrot.slane %v537, 4
          %vm543 = vcmask 1047556
          %v544 = vsel %vm543, %v542, %v531
          %v545 = vrot.slane %v531, 4
          %v546 = vsel %vm543, %v537, %v545
          %v548 = vunpack.c.l.s4 1983009808
          %v549 = vunpack.c.0.s8 %v548
          %v550 = vperm.slane %v544, %v549
          %v552 = vunpack.c.l.s4 1983009808
          %v553 = vunpack.c.0.s8 %v552
          %v554 = vperm.slane %v546, %v553
          %v555 = vrot.slane %v540, 4
          %v556 = vsel %vm543, %v555, %v534
          %v557 = vrot.slane %v534, 4
          %v558 = vsel %vm543, %v540, %v557
          %v560 = vunpack.c.l.s4 1983009808
          %v561 = vunpack.c.0.s8 %v560
          %v562 = vperm.slane %v556, %v561
          %v564 = vunpack.c.l.s4 1983009808
          %v565 = vunpack.c.0.s8 %v564
          %v566 = vperm.slane %v558, %v565
          %v567 = vrot.slane %v562, 4
          %v568 = vsel %vm543, %v567, %v550
          %v569 = vrot.slane %v550, 4
          %v570 = vsel %vm543, %v562, %v569
          %v572 = vunpack.c.l.s4 1934713408
          %v573 = vunpack.c.0.s8 %v572
          %v574 = vperm.slane %v568, %v573
          %v576 = vunpack.c.l.s4 1934713408
          %v577 = vunpack.c.0.s8 %v576
          %v578 = vperm.slane %v570, %v577
          %v579 = vrot.slane %v566, 4
          %v580 = vsel %vm543, %v579, %v554
          %v581 = vrot.slane %v554, 4
          %v582 = vsel %vm543, %v566, %v581
          %v584 = vunpack.c.l.s4 1934713408
          %v585 = vunpack.c.0.s8 %v584
          %v586 = vperm.slane %v580, %v585
          %v588 = vunpack.c.l.s4 1934713408
          %v589 = vunpack.c.0.s8 %v588
          %v590 = vperm.slane %v582, %v589
          %v591 = vrot.slane %v574, 4
          %v592 = vsel %vm543, 0.0, %v591
          %v593 = vrot.slane %v578, 4
          %v594 = vsel %vm543, 0.0, %v593
          %v595 = vrot.slane %v586, 4
          %v596 = vsel %vm543, 0.0, %v595
          %v597 = vrot.slane %v590, 4
          %v598 = vsel %vm543, 0.0, %v597
          %599 = vrot.lane.b32.xlu0 %v531, 112
          %v600 = vpop.permute.xlu0 %599
          %601 = vrot.lane.b32.xlu0 %v534, 112
          %v602 = vpop.permute.xlu0 %601
          %603 = vrot.lane.b32.xlu0 %v537, 112
          %v604 = vpop.permute.xlu0 %603
          %605 = vrot.lane.b32.xlu0 %v540, 112
          %v606 = vpop.permute.xlu0 %605
          %v611 = vrot.slane %v604, 4
          %v612 = vsel %vm543, %v611, %v600
          %v613 = vrot.slane %v600, 4
          %v614 = vsel %vm543, %v604, %v613
          %v616 = vunpack.c.l.s4 1983009808
          %v617 = vunpack.c.0.s8 %v616
          %v618 = vperm.slane %v612, %v617
          %v620 = vunpack.c.l.s4 1983009808
          %v621 = vunpack.c.0.s8 %v620
          %v622 = vperm.slane %v614, %v621
          %v623 = vrot.slane %v606, 4
          %v624 = vsel %vm543, %v623, %v602
          %v625 = vrot.slane %v602, 4
          %v626 = vsel %vm543, %v606, %v625
          %v628 = vunpack.c.l.s4 1983009808
          %v629 = vunpack.c.0.s8 %v628
          %v630 = vperm.slane %v624, %v629
          %v632 = vunpack.c.l.s4 1983009808
          %v633 = vunpack.c.0.s8 %v632
          %v634 = vperm.slane %v626, %v633
          %v635 = vrot.slane %v630, 4
          %v636 = vsel %vm543, %v635, %v618
          %v637 = vrot.slane %v618, 4
          %v638 = vsel %vm543, %v630, %v637
          %v640 = vunpack.c.l.s4 1934713408
          %v641 = vunpack.c.0.s8 %v640
          %v642 = vperm.slane %v636, %v641
          %v644 = vunpack.c.l.s4 1934713408
          %v645 = vunpack.c.0.s8 %v644
          %v646 = vperm.slane %v638, %v645
          %v647 = vrot.slane %v634, 4
          %v648 = vsel %vm543, %v647, %v622
          %v649 = vrot.slane %v622, 4
          %v650 = vsel %vm543, %v634, %v649
          %v652 = vunpack.c.l.s4 1934713408
          %v653 = vunpack.c.0.s8 %v652
          %v654 = vperm.slane %v648, %v653
          %v656 = vunpack.c.l.s4 1934713408
          %v657 = vunpack.c.0.s8 %v656
          %v658 = vperm.slane %v650, %v657
          %v659 = vrot.slane %v642, 4
          %v660 = vsel %vm543, 0.0, %v659
          %v661 = vrot.slane %v646, 4
          %v662 = vsel %vm543, 0.0, %v661
          %v663 = vrot.slane %v654, 4
          %v664 = vsel %vm543, 0.0, %v663
          %v665 = vrot.slane %v658, 4
          %v666 = vsel %vm543, 0.0, %v665
          %675 = vrot.lane.b32.xlu0 %v642, 4
          %v676 = vpop.permute.xlu0 %675
          %677 = vrot.lane.b32.xlu0 %v660, 4
          %v678 = vpop.permute.xlu0 %677
          %679 = vrot.lane.b32.xlu0 %v646, 4
          %v680 = vpop.permute.xlu0 %679
          %681 = vrot.lane.b32.xlu0 %v662, 4
          %v682 = vpop.permute.xlu0 %681
          %683 = vrot.lane.b32.xlu0 %v654, 4
          %v684 = vpop.permute.xlu0 %683
          %685 = vrot.lane.b32.xlu0 %v664, 4
          %v686 = vpop.permute.xlu0 %685
          %687 = vrot.lane.b32.xlu0 %v658, 4
          %v688 = vpop.permute.xlu0 %687
          %689 = vrot.lane.b32.xlu0 %v666, 4
          %v690 = vpop.permute.xlu0 %689
          %vm699 = vcmask 31744
          %v700 = vsel %vm699, %v574, %v676
          %v701 = vsel %vm699, %v592, %v678
          %v702 = vsel %vm699, %v578, %v680
          %v703 = vsel %vm699, %v594, %v682
          %v704 = vsel %vm699, %v586, %v684
          %v705 = vsel %vm699, %v596, %v686
          %v706 = vsel %vm699, %v590, %v688
          %v707 = vsel %vm699, %v598, %v690
          %v708 = vrot.slane %v702, 4
          %v709 = vsel %vm543, %v708, %v700
          %v711 = vunpack.c.l.s4 1983009808
          %v712 = vunpack.c.0.s8 %v711
          %v713 = vperm.slane %v709, %v712
          %v714 = vrot.slane %v703, 4
          %v715 = vsel %vm543, %v714, %v701
          %v717 = vunpack.c.l.s4 1983009808
          %v718 = vunpack.c.0.s8 %v717
          %v719 = vperm.slane %v715, %v718
          %v720 = vrot.slane %v706, 4
          %v721 = vsel %vm543, %v720, %v704
          %v723 = vunpack.c.l.s4 1983009808
          %v724 = vunpack.c.0.s8 %v723
          %v725 = vperm.slane %v721, %v724
          %v726 = vrot.slane %v707, 4
          %v727 = vsel %vm543, %v726, %v705
          %v729 = vunpack.c.l.s4 1983009808
          %v730 = vunpack.c.0.s8 %v729
          %v731 = vperm.slane %v727, %v730
          %v732 = vrot.slane %v719, 4
          %v733 = vsel %vm543, %v732, %v713
          %v734 = vrot.slane %v713, 4
          %v735 = vsel %vm543, %v719, %v734
          %v737 = vunpack.c.l.s4 1934713408
          %v738 = vunpack.c.0.s8 %v737
          %v739 = vperm.slane %v733, %v738
          %v741 = vunpack.c.l.s4 1934713408
          %v742 = vunpack.c.0.s8 %v741
          %v743 = vperm.slane %v735, %v742
          %v744 = vrot.slane %v731, 4
          %v745 = vsel %vm543, %v744, %v725
          %v746 = vrot.slane %v725, 4
          %v747 = vsel %vm543, %v731, %v746
          %v749 = vunpack.c.l.s4 1934713408
          %v750 = vunpack.c.0.s8 %v749
          %v751 = vperm.slane %v745, %v750
          %v753 = vunpack.c.l.s4 1934713408
          %v754 = vunpack.c.0.s8 %v753
          %v755 = vperm.slane %v747, %v754
          %v756 = vrot.slane %v751, 4
          %v757 = vsel %vm543, %v756, %v739
          %v758 = vrot.slane %v739, 4
          %v759 = vsel %vm543, %v751, %v758
          %v760 = vrot.slane %v755, 4
          %v761 = vsel %vm543, %v760, %v743
          %v762 = vrot.slane %v743, 4
          %v763 = vsel %vm543, %v755, %v762
          %v764 = vmul.f32 %v757, 0.35355338
          %v765 = vmul.f32 %v759, 0.35355338
          %v766 = vmul.f32 %v761, 0.35355338
          %v767 = vmul.f32 %v763, 0.35355338
          %v768 = vpack.c.bf16 %v764, %v764
          %v769 = vpack.c.bf16 %v765, %v765
          %v770 = vpack.c.bf16 %v766, %v766
          %v771 = vpack.c.bf16 %v767, %v767
          %vm772 = vcmask 60416
          %773 = vst.msk [vmem:[#allocation2] sm:$0xf] %vm772, %v768
          %774 = vst.msk [vmem:[#allocation2 + $0x4] sm:$0xf] %vm772, %v769
          %775 = vst.msk [vmem:[#allocation2 + $0x8] sm:$0xf] %vm772, %v770
          %776 = vst.msk [vmem:[#allocation2 + $0xc] sm:$0xf] %vm772, %v771
          %777 = vrot.lane.b32.xlu0 %v515, 80
          %v778 = vpop.permute.xlu0 %777
          %v780 = vsel %vm525, %v778, %v520
          %v781 = vld [vmem:[#allocation11] sm:$0xff]
          %783 = vrot.lane.b32.xlu0 %v781, 32
          %v784 = vpop.permute.xlu0 %783
          %v786 = vmul.f32 %v515, %v784
          %v787 = vld [vmem:[#allocation13] sm:$0xff]
          %v788 = vmul.f32 %v780, %v787
          %790 = vrot.lane.b32.xlu0 %v788, 32
          %v791 = vpop.permute.xlu0 %790
          %v793 = vadd.f32 %v786, %v791
          %795 = vrot.lane.b32.xlu0 %v793, 124
          %v796 = vpop.permute.xlu0 %795
          %797 = vrot.lane.b32.xlu0 %v793, 120
          %v798 = vpop.permute.xlu0 %797
          %799 = vrot.lane.b32.xlu0 %v793, 116
          %v800 = vpop.permute.xlu0 %799
          %801 = vrot.lane.b32.xlu0 %v793, 96
          %v802 = vpop.permute.xlu0 %801
          %803 = vrot.lane.b32.xlu0 %v796, 96
          %v804 = vpop.permute.xlu0 %803
          %805 = vrot.lane.b32.xlu0 %v798, 96
          %v806 = vpop.permute.xlu0 %805
          %807 = vrot.lane.b32.xlu0 %v800, 96
          %v808 = vpop.permute.xlu0 %807
          %v813 = vrot.slane %v806, 4
          %v814 = vsel %vm543, %v813, %v802
          %v815 = vrot.slane %v802, 4
          %v816 = vsel %vm543, %v806, %v815
          %v818 = vunpack.c.l.s4 1983009808
          %v819 = vunpack.c.0.s8 %v818
          %v820 = vperm.slane %v814, %v819
          %v822 = vunpack.c.l.s4 1983009808
          %v823 = vunpack.c.0.s8 %v822
          %v824 = vperm.slane %v816, %v823
          %v825 = vrot.slane %v808, 4
          %v826 = vsel %vm543, %v825, %v804
          %v827 = vrot.slane %v804, 4
          %v828 = vsel %vm543, %v808, %v827
          %v830 = vunpack.c.l.s4 1983009808
          %v831 = vunpack.c.0.s8 %v830
          %v832 = vperm.slane %v826, %v831
          %v834 = vunpack.c.l.s4 1983009808
          %v835 = vunpack.c.0.s8 %v834
          %v836 = vperm.slane %v828, %v835
          %v837 = vrot.slane %v832, 4
          %v838 = vsel %vm543, %v837, %v820
          %v839 = vrot.slane %v820, 4
          %v840 = vsel %vm543, %v832, %v839
          %v842 = vunpack.c.l.s4 1934713408
          %v843 = vunpack.c.0.s8 %v842
          %v844 = vperm.slane %v838, %v843
          %v846 = vunpack.c.l.s4 1934713408
          %v847 = vunpack.c.0.s8 %v846
          %v848 = vperm.slane %v840, %v847
          %v849 = vrot.slane %v836, 4
          %v850 = vsel %vm543, %v849, %v824
          %v851 = vrot.slane %v824, 4
          %v852 = vsel %vm543, %v836, %v851
          %v854 = vunpack.c.l.s4 1934713408
          %v855 = vunpack.c.0.s8 %v854
          %v856 = vperm.slane %v850, %v855
          %v858 = vunpack.c.l.s4 1934713408
          %v859 = vunpack.c.0.s8 %v858
          %v860 = vperm.slane %v852, %v859
          %v861 = vrot.slane %v844, 4
          %v862 = vsel %vm543, 0.0, %v861
          %v863 = vrot.slane %v848, 4
          %v864 = vsel %vm543, 0.0, %v863
          %v865 = vrot.slane %v856, 4
          %v866 = vsel %vm543, 0.0, %v865
          %v867 = vrot.slane %v860, 4
          %v868 = vsel %vm543, 0.0, %v867
          %869 = vrot.lane.b32.xlu0 %v793, 80
          %v870 = vpop.permute.xlu0 %869
          %871 = vrot.lane.b32.xlu0 %v796, 80
          %v872 = vpop.permute.xlu0 %871
          %873 = vrot.lane.b32.xlu0 %v798, 80
          %v874 = vpop.permute.xlu0 %873
          %875 = vrot.lane.b32.xlu0 %v800, 80
          %v876 = vpop.permute.xlu0 %875
          %v881 = vrot.slane %v874, 4
          %v882 = vsel %vm543, %v881, %v870
          %v883 = vrot.slane %v870, 4
          %v884 = vsel %vm543, %v874, %v883
          %v886 = vunpack.c.l.s4 1983009808
          %v887 = vunpack.c.0.s8 %v886
          %v888 = vperm.slane %v882, %v887
          %v890 = vunpack.c.l.s4 1983009808
          %v891 = vunpack.c.0.s8 %v890
          %v892 = vperm.slane %v884, %v891
          %v893 = vrot.slane %v876, 4
          %v894 = vsel %vm543, %v893, %v872
          %v895 = vrot.slane %v872, 4
          %v896 = vsel %vm543, %v876, %v895
          %v898 = vunpack.c.l.s4 1983009808
          %v899 = vunpack.c.0.s8 %v898
          %v900 = vperm.slane %v894, %v899
          %v902 = vunpack.c.l.s4 1983009808
          %v903 = vunpack.c.0.s8 %v902
          %v904 = vperm.slane %v896, %v903
          %v905 = vrot.slane %v900, 4
          %v906 = vsel %vm543, %v905, %v888
          %v907 = vrot.slane %v888, 4
          %v908 = vsel %vm543, %v900, %v907
          %v910 = vunpack.c.l.s4 1934713408
          %v911 = vunpack.c.0.s8 %v910
          %v912 = vperm.slane %v906, %v911
          %v914 = vunpack.c.l.s4 1934713408
          %v915 = vunpack.c.0.s8 %v914
          %v916 = vperm.slane %v908, %v915
          %v917 = vrot.slane %v904, 4
          %v918 = vsel %vm543, %v917, %v892
          %v919 = vrot.slane %v892, 4
          %v920 = vsel %vm543, %v904, %v919
          %v922 = vunpack.c.l.s4 1934713408
          %v923 = vunpack.c.0.s8 %v922
          %v924 = vperm.slane %v918, %v923
          %v926 = vunpack.c.l.s4 1934713408
          %v927 = vunpack.c.0.s8 %v926
          %v928 = vperm.slane %v920, %v927
          %v929 = vrot.slane %v912, 4
          %v930 = vsel %vm543, 0.0, %v929
          %v931 = vrot.slane %v916, 4
          %v932 = vsel %vm543, 0.0, %v931
          %v933 = vrot.slane %v924, 4
          %v934 = vsel %vm543, 0.0, %v933
          %v935 = vrot.slane %v928, 4
          %v936 = vsel %vm543, 0.0, %v935
          %945 = vrot.lane.b32.xlu0 %v912, 4
          %v946 = vpop.permute.xlu0 %945
          %947 = vrot.lane.b32.xlu0 %v930, 4
          %v948 = vpop.permute.xlu0 %947
          %949 = vrot.lane.b32.xlu0 %v916, 4
          %v950 = vpop.permute.xlu0 %949
          %951 = vrot.lane.b32.xlu0 %v932, 4
          %v952 = vpop.permute.xlu0 %951
          %953 = vrot.lane.b32.xlu0 %v924, 4
          %v954 = vpop.permute.xlu0 %953
          %955 = vrot.lane.b32.xlu0 %v934, 4
          %v956 = vpop.permute.xlu0 %955
          %957 = vrot.lane.b32.xlu0 %v928, 4
          %v958 = vpop.permute.xlu0 %957
          %959 = vrot.lane.b32.xlu0 %v936, 4
          %v960 = vpop.permute.xlu0 %959
          %v969 = vsel %vm699, %v844, %v946
          %v970 = vsel %vm699, %v862, %v948
          %v971 = vsel %vm699, %v848, %v950
          %v972 = vsel %vm699, %v864, %v952
          %v973 = vsel %vm699, %v856, %v954
          %v974 = vsel %vm699, %v866, %v956
          %v975 = vsel %vm699, %v860, %v958
          %v976 = vsel %vm699, %v868, %v960
          %v977 = vrot.slane %v971, 4
          %v978 = vsel %vm543, %v977, %v969
          %v980 = vunpack.c.l.s4 1983009808
          %v981 = vunpack.c.0.s8 %v980
          %v982 = vperm.slane %v978, %v981
          %v983 = vrot.slane %v972, 4
          %v984 = vsel %vm543, %v983, %v970
          %v986 = vunpack.c.l.s4 1983009808
          %v987 = vunpack.c.0.s8 %v986
          %v988 = vperm.slane %v984, %v987
          %v989 = vrot.slane %v975, 4
          %v990 = vsel %vm543, %v989, %v973
          %v992 = vunpack.c.l.s4 1983009808
          %v993 = vunpack.c.0.s8 %v992
          %v994 = vperm.slane %v990, %v993
          %v995 = vrot.slane %v976, 4
          %v996 = vsel %vm543, %v995, %v974
          %v998 = vunpack.c.l.s4 1983009808
          %v999 = vunpack.c.0.s8 %v998
          %v1000 = vperm.slane %v996, %v999
          %v1001 = vrot.slane %v988, 4
          %v1002 = vsel %vm543, %v1001, %v982
          %v1003 = vrot.slane %v982, 4
          %v1004 = vsel %vm543, %v988, %v1003
          %v1006 = vunpack.c.l.s4 1934713408
          %v1007 = vunpack.c.0.s8 %v1006
          %v1008 = vperm.slane %v1002, %v1007
          %v1010 = vunpack.c.l.s4 1934713408
          %v1011 = vunpack.c.0.s8 %v1010
          %v1012 = vperm.slane %v1004, %v1011
          %v1013 = vrot.slane %v1000, 4
          %v1014 = vsel %vm543, %v1013, %v994
          %v1015 = vrot.slane %v994, 4
          %v1016 = vsel %vm543, %v1000, %v1015
          %v1018 = vunpack.c.l.s4 1934713408
          %v1019 = vunpack.c.0.s8 %v1018
          %v1020 = vperm.slane %v1014, %v1019
          %v1022 = vunpack.c.l.s4 1934713408
          %v1023 = vunpack.c.0.s8 %v1022
          %v1024 = vperm.slane %v1016, %v1023
          %v1025 = vrot.slane %v1020, 4
          %v1026 = vsel %vm543, %v1025, %v1008
          %v1027 = vrot.slane %v1008, 4
          %v1028 = vsel %vm543, %v1020, %v1027
          %v1029 = vrot.slane %v1024, 4
          %v1030 = vsel %vm543, %v1029, %v1012
          %v1031 = vrot.slane %v1012, 4
          %v1032 = vsel %vm543, %v1024, %v1031
          %v1033 = vpack.c.bf16 %v1026, %v1026
          %v1034 = vpack.c.bf16 %v1028, %v1028
          %v1035 = vpack.c.bf16 %v1030, %v1030
          %v1036 = vpack.c.bf16 %v1032, %v1032
          %1037 = vst.msk [vmem:[#allocation3] sm:$0xf] %vm772, %v1033
          %1038 = vst.msk [vmem:[#allocation3 + $0x4] sm:$0xf] %vm772, %v1034
          %1039 = vst.msk [vmem:[#allocation3 + $0x8] sm:$0xf] %vm772, %v1035
          %1040 = vst.msk [vmem:[#allocation3 + $0xc] sm:$0xf] %vm772, %v1036
          %1041 = vrot.lane.b32.xlu0 %v515, 120
          %v1042 = vpop.permute.xlu0 %1041
          %1043 = vrot.lane.b32.xlu0 %v515, 104
          %v1044 = vpop.permute.xlu0 %1043
          %1045 = vrot.lane.b32.xlu0 %v515, 64
          %v1046 = vpop.permute.xlu0 %1045
          %1047 = vrot.lane.b32.xlu0 %v1042, 64
          %v1048 = vpop.permute.xlu0 %1047
          %1049 = vrot.lane.b32.xlu0 %v520, 64
          %v1050 = vpop.permute.xlu0 %1049
          %1051 = vrot.lane.b32.xlu0 %v1044, 64
          %v1052 = vpop.permute.xlu0 %1051
          %v1057 = vrot.slane %v1050, 4
          %v1058 = vsel %vm543, %v1057, %v1046
          %v1059 = vrot.slane %v1046, 4
          %v1060 = vsel %vm543, %v1050, %v1059
          %v1062 = vunpack.c.l.s4 1983009808
          %v1063 = vunpack.c.0.s8 %v1062
          %v1064 = vperm.slane %v1058, %v1063
          %v1066 = vunpack.c.l.s4 1983009808
          %v1067 = vunpack.c.0.s8 %v1066
          %v1068 = vperm.slane %v1060, %v1067
          %v1069 = vrot.slane %v1052, 4
          %v1070 = vsel %vm543, %v1069, %v1048
          %v1071 = vrot.slane %v1048, 4
          %v1072 = vsel %vm543, %v1052, %v1071
          %v1074 = vunpack.c.l.s4 1983009808
          %v1075 = vunpack.c.0.s8 %v1074
          %v1076 = vperm.slane %v1070, %v1075
          %v1078 = vunpack.c.l.s4 1983009808
          %v1079 = vunpack.c.0.s8 %v1078
          %v1080 = vperm.slane %v1072, %v1079
          %v1081 = vrot.slane %v1076, 4
          %v1082 = vsel %vm543, %v1081, %v1064
          %v1083 = vrot.slane %v1064, 4
          %v1084 = vsel %vm543, %v1076, %v1083
          %v1086 = vunpack.c.l.s4 1934713408
          %v1087 = vunpack.c.0.s8 %v1086
          %v1088 = vperm.slane %v1082, %v1087
          %v1090 = vunpack.c.l.s4 1934713408
          %v1091 = vunpack.c.0.s8 %v1090
          %v1092 = vperm.slane %v1084, %v1091
          %v1093 = vrot.slane %v1080, 4
          %v1094 = vsel %vm543, %v1093, %v1068
          %v1095 = vrot.slane %v1068, 4
          %v1096 = vsel %vm543, %v1080, %v1095
          %v1098 = vunpack.c.l.s4 1934713408
          %v1099 = vunpack.c.0.s8 %v1098
          %v1100 = vperm.slane %v1094, %v1099
          %v1102 = vunpack.c.l.s4 1934713408
          %v1103 = vunpack.c.0.s8 %v1102
          %v1104 = vperm.slane %v1096, %v1103
          %v1105 = vrot.slane %v1088, 4
          %v1106 = vsel %vm543, 0.0, %v1105
          %v1107 = vrot.slane %v1092, 4
          %v1108 = vsel %vm543, 0.0, %v1107
          %v1109 = vrot.slane %v1100, 4
          %v1110 = vsel %vm543, 0.0, %v1109
          %v1111 = vrot.slane %v1104, 4
          %v1112 = vsel %vm543, 0.0, %v1111
          %v1113 = vsel %vm543, %v1107, %v1088
          %v1115 = vunpack.c.l.s4 1983009808
          %v1116 = vunpack.c.0.s8 %v1115
          %v1117 = vperm.slane %v1113, %v1116
          %v1118 = vrot.slane %v1108, 4
          %v1119 = vsel %vm543, %v1118, %v1106
          %v1121 = vunpack.c.l.s4 1983009808
          %v1122 = vunpack.c.0.s8 %v1121
          %v1123 = vperm.slane %v1119, %v1122
          %v1124 = vsel %vm543, %v1111, %v1100
          %v1126 = vunpack.c.l.s4 1983009808
          %v1127 = vunpack.c.0.s8 %v1126
          %v1128 = vperm.slane %v1124, %v1127
          %v1129 = vrot.slane %v1112, 4
          %v1130 = vsel %vm543, %v1129, %v1110
          %v1132 = vunpack.c.l.s4 1983009808
          %v1133 = vunpack.c.0.s8 %v1132
          %v1134 = vperm.slane %v1130, %v1133
          %v1135 = vrot.slane %v1123, 4
          %v1136 = vsel %vm543, %v1135, %v1117
          %v1137 = vrot.slane %v1117, 4
          %v1138 = vsel %vm543, %v1123, %v1137
          %v1140 = vunpack.c.l.s4 1934713408
          %v1141 = vunpack.c.0.s8 %v1140
          %v1142 = vperm.slane %v1136, %v1141
          %v1144 = vunpack.c.l.s4 1934713408
          %v1145 = vunpack.c.0.s8 %v1144
          %v1146 = vperm.slane %v1138, %v1145
          %v1147 = vrot.slane %v1134, 4
          %v1148 = vsel %vm543, %v1147, %v1128
          %v1149 = vrot.slane %v1128, 4
          %v1150 = vsel %vm543, %v1134, %v1149
          %v1152 = vunpack.c.l.s4 1934713408
          %v1153 = vunpack.c.0.s8 %v1152
          %v1154 = vperm.slane %v1148, %v1153
          %v1156 = vunpack.c.l.s4 1934713408
          %v1157 = vunpack.c.0.s8 %v1156
          %v1158 = vperm.slane %v1150, %v1157
          %v1159 = vrot.slane %v1154, 4
          %v1160 = vsel %vm543, %v1159, %v1142
          %v1161 = vrot.slane %v1142, 4
          %v1162 = vsel %vm543, %v1154, %v1161
          %v1163 = vrot.slane %v1158, 4
          %v1164 = vsel %vm543, %v1163, %v1146
          %v1165 = vrot.slane %v1146, 4
          %v1166 = vsel %vm543, %v1158, %v1165
          %v1167 = vpack.c.bf16 %v1160, %v1160
          %v1168 = vpack.c.bf16 %v1162, %v1162
          %v1169 = vpack.c.bf16 %v1164, %v1164
          %v1170 = vpack.c.bf16 %v1166, %v1166
          %1171 = vst.msk [vmem:[#allocation4] sm:$0xf] %vm772, %v1167
          %1172 = vst.msk [vmem:[#allocation4 + $0x4] sm:$0xf] %vm772, %v1168
          %1173 = vst.msk [vmem:[#allocation4 + $0x8] sm:$0xf] %vm772, %v1169
          %1174 = vst.msk [vmem:[#allocation4 + $0xc] sm:$0xf] %vm772, %v1170
        $region80: #{tpu_custom_call.1} parent=55 // pred_fallthru
          _
        // Predicated region
        $region81: #{tpu_custom_call.1} parent=55 // pred_check
          %p1175 = pneg %p435
        $region82: #{tpu_custom_call.1} parent=55 // pred_check_branch
          %1177 = sbr.rel (%p1175) target = $region84
        $region83: #{tpu_custom_call.1} parent=55 // pred_region
          %vm1178 = vcmask 7168
          %1179 = vst.msk [vmem:[#allocation5] sm:$0xff] %vm1178, -1e+30
          %1180 = vst.msk [vmem:[#allocation5 + $0x8] sm:$0xff] %vm1178, -1e+30
          %1181 = vst.msk [vmem:[#allocation5 + $0x10] sm:$0xff] %vm1178, -1e+30
          %1182 = vst.msk [vmem:[#allocation5 + $0x18] sm:$0xff] %vm1178, -1e+30
          %1183 = vst.msk [vmem:[#allocation6] sm:$0xff] %vm1178, 0.0
          %1184 = vst.msk [vmem:[#allocation6 + $0x8] sm:$0xff] %vm1178, 0.0
          %1185 = vst.msk [vmem:[#allocation6 + $0x10] sm:$0xff] %vm1178, 0.0
          %1186 = vst.msk [vmem:[#allocation6 + $0x18] sm:$0xff] %vm1178, 0.0
          %vm1187 = vcmask 64512
          %1188 = vst.msk [vmem:[#allocation7] sm:$0xff] %vm1187, 0.0
          %1189 = vst.msk [vmem:[#allocation7 + $0x8] sm:$0xff] %vm1187, 0.0
          %1190 = vst.msk [vmem:[#allocation7 + $0x10] sm:$0xff] %vm1187, 0.0
          %1191 = vst.msk [vmem:[#allocation7 + $0x18] sm:$0xff] %vm1187, 0.0
        $region84: #{tpu_custom_call.1} parent=55 // pred_fallthru
          _
        %s1192 = smul.u32 %s34, 8
        %s1193 = smul.u32 %s35, 8
        %s1194 = sadd.s32 %s1192, 7
        %p1195 = scmp.le.s32.totalorder %s1193, %s1194
        // Predicated region
        $region85: #{tpu_custom_call.1} parent=55 // pred_check
          %p1196 = pneg %p1195
        $region86: #{tpu_custom_call.1} parent=55 // pred_check_branch
          %1198 = sbr.rel (%p1196) target = $region88
        $region87: #{tpu_custom_call.1} parent=55 // pred_region
          %s1199 = sshra.s32 %s1192, 3
          %s1200 = sand.u32 %s1192, 7
          %s1201 = smul.addr %s1199, 4
          %s1202 = scalar_lea.vmem [#allocation2], %s1201
          %v1203 = vld [vmem:[%s1202] sm:$0xf]
          %v1204 = vld [vmem:[%s1202 + $0x4] sm:$0xf]
          %v1205 = vld [vmem:[%s1202 + $0x8] sm:$0xf]
          %v1206 = vld [vmem:[%s1202 + $0xc] sm:$0xf]
          %s1207 = sshra.s32 %s1193, 3
          %s1208 = sand.u32 %s1193, 7
          %s1209 = smul.addr %s1207, 4
          %s1210 = scalar_lea.vmem [#allocation3], %s1209
          %v1211 = vld [vmem:[%s1210] sm:$0xf]
          %v1212 = vld [vmem:[%s1210 + $0x4] sm:$0xf]
          %v1213 = vld [vmem:[%s1210 + $0x8] sm:$0xf]
          %v1214 = vld [vmem:[%s1210 + $0xc] sm:$0xf]
          %s1215 = smul.addr %s1207, 4
          %s1216 = scalar_lea.vmem [#allocation4], %s1215
          %v1217 = vld [vmem:[%s1216] sm:$0xf]
          %v1218 = vld [vmem:[%s1216 + $0x4] sm:$0xf]
          %v1219 = vld [vmem:[%s1216 + $0x8] sm:$0xf]
          %v1220 = vld [vmem:[%s1216 + $0xc] sm:$0xf]
          %v1221 = vlaneseq
          %v1222 = vshrl.u32 %v1221, 7
          %v1223 = vstv %s1192
          %v1224 = vadd.s32 %v1223, %v1222
          %v1225 = vlaneseq
          %v1226 = vand.u32 %v1225, 127
          %v1227 = vstv %s1193
          %v1228 = vadd.s32 %v1227, %v1226
          %vm1229 = vcmp.ge.s32.totalorder %v1224, %v1228
          %v1230 = vsel %vm1229, 0.0, -1e+30
          %vm1231 = vcmask 64512
          %v1233 = vsel %vm1231, %v1203, 0
          %v1236 = vsel %vm1231, %v1211, 0
          %1238 = vmatpush.bf16.xpose.msra.mxu0 0
          %1239 = vmatpush.bf16.xpose.msra.mxu0 0
          %1240 = vmatpush.bf16.xpose.msra.mxu0 0
          %1241 = vmatpush.bf16.xpose.msra.mxu0 0
          %1242 = vmatpush.bf16.xpose.msra.mxu0 0
          %1243 = vmatpush.bf16.xpose.msra.mxu0 0
          %1244 = vmatpush.bf16.xpose.msra.mxu0 0
          %1245 = vmatpush.bf16.xpose.msra.mxu0 %v1236
          %1246 = vmatmul.bf16.gmra.mxu0 %v1233
          %v1247 = vpop.f32.mrf.mxu0
          %v1248 = vadd.f32 %v1230, %v1247
          %v1249 = vpop.f32.mrf.mxu0
          %1250 = vdwg.mxu0
          %v1252 = vsel %vm1231, %v1204, 0
          %v1255 = vsel %vm1231, %v1212, 0
          %1257 = vmatpush.bf16.xpose.msra.mxu0 0
          %1258 = vmatpush.bf16.xpose.msra.mxu0 0
          %1259 = vmatpush.bf16.xpose.msra.mxu0 0
          %1260 = vmatpush.bf16.xpose.msra.mxu0 0
          %1261 = vmatpush.bf16.xpose.msra.mxu0 0
          %1262 = vmatpush.bf16.xpose.msra.mxu0 0
          %1263 = vmatpush.bf16.xpose.msra.mxu0 0
          %1264 = vmatpush.bf16.xpose.msra.mxu0 %v1255
          %1265 = vmatmul.bf16.gmra.mxu0 %v1252
          %v1266 = vpop.f32.mrf.mxu0
          %v1267 = vadd.f32 %v1230, %v1266
          %v1268 = vpop.f32.mrf.mxu0
          %1269 = vdwg.mxu0
          %v1271 = vsel %vm1231, %v1205, 0
          %v1274 = vsel %vm1231, %v1213, 0
          %1276 = vmatpush.bf16.xpose.msra.mxu0 0
          %1277 = vmatpush.bf16.xpose.msra.mxu0 0
          %1278 = vmatpush.bf16.xpose.msra.mxu0 0
          %1279 = vmatpush.bf16.xpose.msra.mxu0 0
          %1280 = vmatpush.bf16.xpose.msra.mxu0 0
          %1281 = vmatpush.bf16.xpose.msra.mxu0 0
          %1282 = vmatpush.bf16.xpose.msra.mxu0 0
          %1283 = vmatpush.bf16.xpose.msra.mxu0 %v1274
          %1284 = vmatmul.bf16.gmra.mxu0 %v1271
          %v1285 = vpop.f32.mrf.mxu0
          %v1286 = vadd.f32 %v1230, %v1285
          %v1287 = vpop.f32.mrf.mxu0
          %1288 = vdwg.mxu0
          %v1290 = vsel %vm1231, %v1206, 0
          %v1293 = vsel %vm1231, %v1214, 0
          %1295 = vmatpush.bf16.xpose.msra.mxu0 0
          %1296 = vmatpush.bf16.xpose.msra.mxu0 0
          %1297 = vmatpush.bf16.xpose.msra.mxu0 0
          %1298 = vmatpush.bf16.xpose.msra.mxu0 0
          %1299 = vmatpush.bf16.xpose.msra.mxu0 0
          %1300 = vmatpush.bf16.xpose.msra.mxu0 0
          %1301 = vmatpush.bf16.xpose.msra.mxu0 0
          %1302 = vmatpush.bf16.xpose.msra.mxu0 %v1293
          %1303 = vmatmul.bf16.gmra.mxu0 %v1290
          %v1304 = vpop.f32.mrf.mxu0
          %v1305 = vadd.f32 %v1230, %v1304
          %v1306 = vpop.f32.mrf.mxu0
          %1307 = vdwg.mxu0
          %v1308 = vld [vmem:[#allocation5] sm:$0xff]
          %v1309 = vld [vmem:[#allocation5 + $0x8] sm:$0xff]
          %v1310 = vld [vmem:[#allocation5 + $0x10] sm:$0xff]
          %v1311 = vld [vmem:[#allocation5 + $0x18] sm:$0xff]
          %v1312 = vsel %vm1231, %v1248, -inf
          %1313 = vmax.xlane.f32.xlu0 %v1312
          %v1314 = vpop.xlane.xlu0 %1313
          %v1315 = vsel %vm1231, %v1267, -inf
          %1316 = vmax.xlane.f32.xlu0 %v1315
          %v1317 = vpop.xlane.xlu0 %1316
          %v1318 = vsel %vm1231, %v1286, -inf
          %1319 = vmax.xlane.f32.xlu0 %v1318
          %v1320 = vpop.xlane.xlu0 %1319
          %v1321 = vsel %vm1231, %v1305, -inf
          %1322 = vmax.xlane.f32.xlu0 %v1321
          %v1323 = vpop.xlane.xlu0 %1322
          %v1324 = vmax.f32 %v1308, %v1314
          %v1325 = vmax.f32 %v1309, %v1317
          %v1326 = vmax.f32 %v1310, %v1320
          %v1327 = vmax.f32 %v1311, %v1323
          %v1328 = vsub.f32 %v1308, %v1324
          %v1329 = vsub.f32 %v1309, %v1325
          %v1330 = vsub.f32 %v1310, %v1326
          %v1331 = vsub.f32 %v1311, %v1327
          %v1332 = vmul.f32 %v1328, 1.442695
          %v1333 = vpow.pop %v1332
          %v1334 = vmul.f32 %v1329, 1.442695
          %v1335 = vpow.pop %v1334
          %v1336 = vmul.f32 %v1330, 1.442695
          %v1337 = vpow.pop %v1336
          %v1338 = vmul.f32 %v1331, 1.442695
          %v1339 = vpow.pop %v1338
          %1341 = vset.pattern.permute.xlu0 0
          %1342 = vperm.xlu0 %1341, %v1324
          %v1343 = vpop.permute.xlu0 %1342
          %1346 = vset.pattern.permute.xlu0 0
          %1347 = vperm.xlu0 %1346, %v1325
          %v1348 = vpop.permute.xlu0 %1347
          %1351 = vset.pattern.permute.xlu0 0
          %1352 = vperm.xlu0 %1351, %v1326
          %v1353 = vpop.permute.xlu0 %1352
          %1356 = vset.pattern.permute.xlu0 0
          %1357 = vperm.xlu0 %1356, %v1327
          %v1358 = vpop.permute.xlu0 %1357
          %v1360 = vsub.f32 %v1248, %v1343
          %v1361 = vsub.f32 %v1267, %v1348
          %v1362 = vsub.f32 %v1286, %v1353
          %v1363 = vsub.f32 %v1305, %v1358
          %v1364 = vmul.f32 %v1360, 1.442695
          %v1365 = vpow.pop %v1364
          %v1366 = vmul.f32 %v1361, 1.442695
          %v1367 = vpow.pop %v1366
          %v1368 = vmul.f32 %v1362, 1.442695
          %v1369 = vpow.pop %v1368
          %v1370 = vmul.f32 %v1363, 1.442695
          %v1371 = vpow.pop %v1370
          %v1372 = vld [vmem:[#allocation6] sm:$0xff]
          %v1373 = vld [vmem:[#allocation6 + $0x8] sm:$0xff]
          %v1374 = vld [vmem:[#allocation6 + $0x10] sm:$0xff]
          %v1375 = vld [vmem:[#allocation6 + $0x18] sm:$0xff]
          %v1376 = vmul.f32 %v1333, %v1372
          %v1377 = vmul.f32 %v1335, %v1373
          %v1378 = vmul.f32 %v1337, %v1374
          %v1379 = vmul.f32 %v1339, %v1375
          %v1380 = vsel %vm1231, %v1365, 0.0
          %1381 = vadd.xlane.f32.xlu0 %v1380
          %v1382 = vpop.xlane.xlu0 %1381
          %v1383 = vsel %vm1231, %v1367, 0.0
          %1384 = vadd.xlane.f32.xlu0 %v1383
          %v1385 = vpop.xlane.xlu0 %1384
          %v1386 = vsel %vm1231, %v1369, 0.0
          %1387 = vadd.xlane.f32.xlu0 %v1386
          %v1388 = vpop.xlane.xlu0 %1387
          %v1389 = vsel %vm1231, %v1371, 0.0
          %1390 = vadd.xlane.f32.xlu0 %v1389
          %v1391 = vpop.xlane.xlu0 %1390
          %v1392 = vadd.f32 %v1376, %v1382
          %v1393 = vadd.f32 %v1377, %v1385
          %v1394 = vadd.f32 %v1378, %v1388
          %v1395 = vadd.f32 %v1379, %v1391
          %vm1396 = vcmask 7168
          %1397 = vst.msk [vmem:[#allocation6] sm:$0xff] %vm1396, %v1392
          %1398 = vst.msk [vmem:[#allocation6 + $0x8] sm:$0xff] %vm1396, %v1393
          %1399 = vst.msk [vmem:[#allocation6 + $0x10] sm:$0xff] %vm1396, %v1394
          %1400 = vst.msk [vmem:[#allocation6 + $0x18] sm:$0xff] %vm1396, %v1395
          %v1401 = vld [vmem:[#allocation7] sm:$0xff]
          %v1402 = vld [vmem:[#allocation7 + $0x8] sm:$0xff]
          %v1403 = vld [vmem:[#allocation7 + $0x10] sm:$0xff]
          %v1404 = vld [vmem:[#allocation7 + $0x18] sm:$0xff]
          %1406 = vset.pattern.permute.xlu0 0
          %1407 = vperm.xlu0 %1406, %v1333
          %v1408 = vpop.permute.xlu0 %1407
          %1411 = vset.pattern.permute.xlu0 0
          %1412 = vperm.xlu0 %1411, %v1335
          %v1413 = vpop.permute.xlu0 %1412
          %1416 = vset.pattern.permute.xlu0 0
          %1417 = vperm.xlu0 %1416, %v1337
          %v1418 = vpop.permute.xlu0 %1417
          %1421 = vset.pattern.permute.xlu0 0
          %1422 = vperm.xlu0 %1421, %v1339
          %v1423 = vpop.permute.xlu0 %1422
          %v1425 = vmul.f32 %v1408, %v1401
          %v1426 = vmul.f32 %v1413, %v1402
          %v1427 = vmul.f32 %v1418, %v1403
          %v1428 = vmul.f32 %v1423, %v1404
          %v1429 = vpack.c.bf16 %v1365, %v1365
          %v1430 = vpack.c.bf16 %v1367, %v1367
          %v1431 = vpack.c.bf16 %v1369, %v1369
          %v1432 = vpack.c.bf16 %v1371, %v1371
          %v1434 = vsel %vm1231, %v1429, 0
          %vm1436 = vcmask 1043456
          %v1438 = vsel %vm1436, %v1217, 0
          %1440 = vmatpush.bf16.msra.mxu0 0
          %1441 = vmatpush.bf16.msra.mxu0 0
          %1442 = vmatpush.bf16.msra.mxu0 0
          %1443 = vmatpush.bf16.msra.mxu0 0
          %1444 = vmatpush.bf16.msra.mxu0 0
          %1445 = vmatpush.bf16.msra.mxu0 0
          %1446 = vmatpush.bf16.msra.mxu0 0
          %1447 = vmatpush.bf16.msra.mxu0 %v1438
          %1448 = vmatmul.bf16.gmra.mxu0 %v1434
          %v1449 = vpop.f32.mrf.mxu0
          %v1450 = vadd.f32 0.0, %v1449
          %v1451 = vpop.f32.mrf.mxu0
          %1452 = vdwg.mxu0
          %v1454 = vsel %vm1231, %v1430, 0
          %v1457 = vsel %vm1436, %v1218, 0
          %1459 = vmatpush.bf16.msra.mxu0 0
          %1460 = vmatpush.bf16.msra.mxu0 0
          %1461 = vmatpush.bf16.msra.mxu0 0
          %1462 = vmatpush.bf16.msra.mxu0 0
          %1463 = vmatpush.bf16.msra.mxu0 0
          %1464 = vmatpush.bf16.msra.mxu0 0
          %1465 = vmatpush.bf16.msra.mxu0 0
          %1466 = vmatpush.bf16.msra.mxu0 %v1457
          %1467 = vmatmul.bf16.gmra.mxu0 %v1454
          %v1468 = vpop.f32.mrf.mxu0
          %v1469 = vadd.f32 0.0, %v1468
          %v1470 = vpop.f32.mrf.mxu0
          %1471 = vdwg.mxu0
          %v1473 = vsel %vm1231, %v1431, 0
          %v1476 = vsel %vm1436, %v1219, 0
          %1478 = vmatpush.bf16.msra.mxu0 0
          %1479 = vmatpush.bf16.msra.mxu0 0
          %1480 = vmatpush.bf16.msra.mxu0 0
          %1481 = vmatpush.bf16.msra.mxu0 0
          %1482 = vmatpush.bf16.msra.mxu0 0
          %1483 = vmatpush.bf16.msra.mxu0 0
          %1484 = vmatpush.bf16.msra.mxu0 0
          %1485 = vmatpush.bf16.msra.mxu0 %v1476
          %1486 = vmatmul.bf16.gmra.mxu0 %v1473
          %v1487 = vpop.f32.mrf.mxu0
          %v1488 = vadd.f32 0.0, %v1487
          %v1489 = vpop.f32.mrf.mxu0
          %1490 = vdwg.mxu0
          %v1492 = vsel %vm1231, %v1432, 0
          %v1495 = vsel %vm1436, %v1220, 0
          %1497 = vmatpush.bf16.msra.mxu0 0
          %1498 = vmatpush.bf16.msra.mxu0 0
          %1499 = vmatpush.bf16.msra.mxu0 0
          %1500 = vmatpush.bf16.msra.mxu0 0
          %1501 = vmatpush.bf16.msra.mxu0 0
          %1502 = vmatpush.bf16.msra.mxu0 0
          %1503 = vmatpush.bf16.msra.mxu0 0
          %1504 = vmatpush.bf16.msra.mxu0 %v1495
          %1505 = vmatmul.bf16.gmra.mxu0 %v1492
          %v1506 = vpop.f32.mrf.mxu0
          %v1507 = vadd.f32 0.0, %v1506
          %v1508 = vpop.f32.mrf.mxu0
          %1509 = vdwg.mxu0
          %v1510 = vadd.f32 %v1425, %v1450
          %v1511 = vadd.f32 %v1426, %v1469
          %v1512 = vadd.f32 %v1427, %v1488
          %v1513 = vadd.f32 %v1428, %v1507
          %1514 = vst.msk [vmem:[#allocation7] sm:$0xff] %vm1231, %v1510
          %1515 = vst.msk [vmem:[#allocation7 + $0x8] sm:$0xff] %vm1231, %v1511
          %1516 = vst.msk [vmem:[#allocation7 + $0x10] sm:$0xff] %vm1231, %v1512
          %1517 = vst.msk [vmem:[#allocation7 + $0x18] sm:$0xff] %vm1231, %v1513
          %1518 = vst.msk [vmem:[#allocation5] sm:$0xff] %vm1396, %v1324
          %1519 = vst.msk [vmem:[#allocation5 + $0x8] sm:$0xff] %vm1396, %v1325
          %1520 = vst.msk [vmem:[#allocation5 + $0x10] sm:$0xff] %vm1396, %v1326
          %1521 = vst.msk [vmem:[#allocation5 + $0x18] sm:$0xff] %vm1396, %v1327
        $region88: #{tpu_custom_call.1} parent=55 // pred_fallthru
          _
        // Predicated region
        $region89: #{tpu_custom_call.1} parent=55 // pred_check
          %p1522 = pneg %p435
        $region90: #{tpu_custom_call.1} parent=55 // pred_check_branch
          %1524 = sbr.rel (%p1522) target = $region92
        $region91: #{tpu_custom_call.1} parent=55 // pred_region
          %v1525 = vld [vmem:[#allocation7] sm:$0xff]
          %v1526 = vld [vmem:[#allocation7 + $0x8] sm:$0xff]
          %v1527 = vld [vmem:[#allocation7 + $0x10] sm:$0xff]
          %v1528 = vld [vmem:[#allocation7 + $0x18] sm:$0xff]
          %v1529 = vld [vmem:[#allocation6] sm:$0xff]
          %v1530 = vld [vmem:[#allocation6 + $0x8] sm:$0xff]
          %v1531 = vld [vmem:[#allocation6 + $0x10] sm:$0xff]
          %v1532 = vld [vmem:[#allocation6 + $0x18] sm:$0xff]
          %v1533 = vrcp.pop %v1529
          %v1534 = vrcp.pop %v1530
          %v1535 = vrcp.pop %v1531
          %v1536 = vrcp.pop %v1532
          %1538 = vset.pattern.permute.xlu0 0
          %1539 = vperm.xlu0 %1538, %v1533
          %v1540 = vpop.permute.xlu0 %1539
          %1543 = vset.pattern.permute.xlu0 0
          %1544 = vperm.xlu0 %1543, %v1534
          %v1545 = vpop.permute.xlu0 %1544
          %1548 = vset.pattern.permute.xlu0 0
          %1549 = vperm.xlu0 %1548, %v1535
          %v1550 = vpop.permute.xlu0 %1549
          %1553 = vset.pattern.permute.xlu0 0
          %1554 = vperm.xlu0 %1553, %v1536
          %v1555 = vpop.permute.xlu0 %1554
          %v1557 = vmul.f32 %v1525, %v1540
          %v1558 = vmul.f32 %v1526, %v1545
          %v1559 = vmul.f32 %v1527, %v1550
          %v1560 = vmul.f32 %v1528, %v1555
          %v1561 = vrot.slane %v1559, 4
          %vm1562 = vcmask 1047556
          %v1563 = vsel %vm1562, %v1561, %v1557
          %v1564 = vrot.slane %v1557, 4
          %v1565 = vsel %vm1562, %v1559, %v1564
          %v1567 = vunpack.c.l.s4 1983009808
          %v1568 = vunpack.c.0.s8 %v1567
          %v1569 = vperm.slane %v1563, %v1568
          %v1571 = vunpack.c.l.s4 1983009808
          %v1572 = vunpack.c.0.s8 %v1571
          %v1573 = vperm.slane %v1565, %v1572
          %v1574 = vrot.slane %v1560, 4
          %v1575 = vsel %vm1562, %v1574, %v1558
          %v1576 = vrot.slane %v1558, 4
          %v1577 = vsel %vm1562, %v1560, %v1576
          %v1579 = vunpack.c.l.s4 1983009808
          %v1580 = vunpack.c.0.s8 %v1579
          %v1581 = vperm.slane %v1575, %v1580
          %v1583 = vunpack.c.l.s4 1983009808
          %v1584 = vunpack.c.0.s8 %v1583
          %v1585 = vperm.slane %v1577, %v1584
          %v1586 = vrot.slane %v1581, 4
          %v1587 = vsel %vm1562, %v1586, %v1569
          %v1588 = vrot.slane %v1569, 4
          %v1589 = vsel %vm1562, %v1581, %v1588
          %v1591 = vunpack.c.l.s4 1934713408
          %v1592 = vunpack.c.0.s8 %v1591
          %v1593 = vperm.slane %v1587, %v1592
          %v1595 = vunpack.c.l.s4 1934713408
          %v1596 = vunpack.c.0.s8 %v1595
          %v1597 = vperm.slane %v1589, %v1596
          %v1598 = vrot.slane %v1585, 4
          %v1599 = vsel %vm1562, %v1598, %v1573
          %v1600 = vrot.slane %v1573, 4
          %v1601 = vsel %vm1562, %v1585, %v1600
          %v1603 = vunpack.c.l.s4 1934713408
          %v1604 = vunpack.c.0.s8 %v1603
          %v1605 = vperm.slane %v1599, %v1604
          %v1607 = vunpack.c.l.s4 1934713408
          %v1608 = vunpack.c.0.s8 %v1607
          %v1609 = vperm.slane %v1601, %v1608
          %v1610 = vrot.slane %v1593, 4
          %v1611 = vsel %vm1562, 0.0, %v1610
          %v1612 = vrot.slane %v1597, 4
          %v1613 = vsel %vm1562, 0.0, %v1612
          %v1614 = vrot.slane %v1605, 4
          %v1615 = vsel %vm1562, 0.0, %v1614
          %v1616 = vrot.slane %v1609, 4
          %v1617 = vsel %vm1562, 0.0, %v1616
          %v1618 = vsel %vm1562, %v1612, %v1593
          %v1620 = vunpack.c.l.s4 1983009808
          %v1621 = vunpack.c.0.s8 %v1620
          %v1622 = vperm.slane %v1618, %v1621
          %v1623 = vrot.slane %v1613, 4
          %v1624 = vsel %vm1562, %v1623, %v1611
          %v1626 = vunpack.c.l.s4 1983009808
          %v1627 = vunpack.c.0.s8 %v1626
          %v1628 = vperm.slane %v1624, %v1627
          %v1629 = vsel %vm1562, %v1616, %v1605
          %v1631 = vunpack.c.l.s4 1983009808
          %v1632 = vunpack.c.0.s8 %v1631
          %v1633 = vperm.slane %v1629, %v1632
          %v1634 = vrot.slane %v1617, 4
          %v1635 = vsel %vm1562, %v1634, %v1615
          %v1637 = vunpack.c.l.s4 1983009808
          %v1638 = vunpack.c.0.s8 %v1637
          %v1639 = vperm.slane %v1635, %v1638
          %v1640 = vrot.slane %v1628, 4
          %v1641 = vsel %vm1562, %v1640, %v1622
          %v1642 = vrot.slane %v1622, 4
          %v1643 = vsel %vm1562, %v1628, %v1642
          %v1645 = vunpack.c.l.s4 1934713408
          %v1646 = vunpack.c.0.s8 %v1645
          %v1647 = vperm.slane %v1641, %v1646
          %v1649 = vunpack.c.l.s4 1934713408
          %v1650 = vunpack.c.0.s8 %v1649
          %v1651 = vperm.slane %v1643, %v1650
          %v1652 = vrot.slane %v1639, 4
          %v1653 = vsel %vm1562, %v1652, %v1633
          %v1654 = vrot.slane %v1633, 4
          %v1655 = vsel %vm1562, %v1639, %v1654
          %v1657 = vunpack.c.l.s4 1934713408
          %v1658 = vunpack.c.0.s8 %v1657
          %v1659 = vperm.slane %v1653, %v1658
          %v1661 = vunpack.c.l.s4 1934713408
          %v1662 = vunpack.c.0.s8 %v1661
          %v1663 = vperm.slane %v1655, %v1662
          %v1664 = vrot.slane %v1659, 4
          %v1665 = vsel %vm1562, %v1664, %v1647
          %v1666 = vrot.slane %v1647, 4
          %v1667 = vsel %vm1562, %v1659, %v1666
          %v1668 = vrot.slane %v1663, 4
          %v1669 = vsel %vm1562, %v1668, %v1651
          %v1670 = vrot.slane %v1651, 4
          %v1671 = vsel %vm1562, %v1663, %v1670
          %1673 = vrot.lane.b32.xlu0 %v1667, 8
          %v1674 = vpop.permute.xlu0 %1673
          %1677 = vrot.lane.b32.xlu0 %v1669, 16
          %v1678 = vpop.permute.xlu0 %1677
          %1681 = vrot.lane.b32.xlu0 %v1671, 24
          %v1682 = vpop.permute.xlu0 %1681
          %vm1684 = vcmask 64512
          %v1685 = vsel %vm1684, %v1665, %v1674
          %vm1686 = vcmask 130048
          %v1687 = vsel %vm1686, %v1685, %v1678
          %vm1688 = vcmask 195584
          %v1689 = vsel %vm1688, %v1687, %v1682
          %v1690 = vpack.c.bf16 %v1689, %v1689
          %v1691 = vld [vmem:[#allocation16] sm:$0xf]
          %v1692 = vld [vmem:[#allocation16 + $0x4] sm:$0xf]
          %v1693 = vld [vmem:[#allocation16 + $0x8] sm:$0xf]
          %v1694 = vld [vmem:[#allocation16 + $0xc] sm:$0xf]
          %v1695 = vld [vmem:[%s8] sm:$0x1]
          %v1697 = vperm.slane %v1695, 0
          %v1703 = vunpack.c.l.b16 %v1691
          %v1704 = vunpack.c.l.b16 %v1692
          %v1705 = vunpack.c.l.b16 %v1693
          %v1706 = vunpack.c.l.b16 %v1694
          %v1707 = vpack.c.b16 %v1704, %v1703
          %v1708 = vpack.c.b16 %v1706, %v1705
          %vm1711 = vcmask 261120
          %v1713 = vsel %vm1711, %v1690, 0
          %1715 = vmatpush.bf16.msra.mxu0 0
          %1716 = vmatpush.bf16.msra.mxu0 0
          %1717 = vmatpush.bf16.msra.mxu0 0
          %1718 = vmatpush.bf16.msra.mxu0 0
          %1719 = vmatpush.bf16.msra.mxu0 0
          %1720 = vmatpush.bf16.msra.mxu0 0
          %1721 = vmatpush.bf16.msra.mxu0 %v1708
          %1722 = vmatpush.bf16.msra.mxu0 %v1707
          %1723 = vmatmul.bf16.gmra.mxu0 %v1713
          %v1724 = vpop.f32.mrf.mxu0
          %v1725 = vadd.f32 %v1697, %v1724
          %v1726 = vpop.f32.mrf.mxu0
          %1727 = vdwg.mxu0
          %1728 = vst.msk [vmem:[%s432] sm:$0xff] %vm1711, %v1725
        $region92: #{tpu_custom_call.1} parent=55 // pred_fallthru
          _
        %s1729 = sand.u32 %s251, 1
        %s1730 = scalar_lea.sflag [#allocation10], %s1729
        %s1731 = sand.u32 %s251, 1
        %s1732 = smul.addr %s1731, 8
        %s1733 = scalar_lea.vmem [#allocation17], %s1732
        // Predicated region
        $region93: #{tpu_custom_call.1} parent=55 // pred_check
          %p1734 = pneg %p261
        $region94: #{tpu_custom_call.1} parent=55 // pred_check_branch
          %1736 = sbr.rel (%p1734) target = $region96
        $region95: #{tpu_custom_call.1} parent=55 // pred_region
          %1738 = vsyncadd %s1730, 0
          %s1739 = sadd.s32 %s34, %s33
          %s1740 = smul.addr %s1739, 8
          %s1741 = scalar_lea.hbm %s9, %s1740
          %s1743 = sshll.u32 %s1733, 4
          %s1744 = int_to_ptr.vmem [resolvable:$true] %s1743
          %s1745 = sshll.u32 %s1741, 4
          %s1746 = int_to_ptr.hbm [resolvable:$true] %s1745
          %1748 = dma.vmem_to_hbm [thread:$0]  %s1744, 128, %s1746, %s1730
        $region96: #{tpu_custom_call.1} parent=55 // pred_fallthru
          _
      $region56: #{tpu_custom_call.1} parent=5 // pred_fallthru
        _
      %p1749 = scmp.le.s32.totalorder 2, %s23
      // Predicated region
      $region97: #{tpu_custom_call.1} parent=5 // pred_check
        %p1750 = pneg %p1749
      $region98: #{tpu_custom_call.1} parent=5 // pred_check_branch
        %1752 = sbr.rel (%p1750) target = $region100
      $region99: #{tpu_custom_call.1} parent=5 // pred_region
        %s1753 = ssub.s32 %s23, 2
        // Predicated region
        $region101: #{tpu_custom_call.1} parent=99 // pred_check
          %p1754 = pneg %p267
        $region102: #{tpu_custom_call.1} parent=99 // pred_check_branch
          %1756 = sbr.rel (%p1754) target = $region104
        $region103: #{tpu_custom_call.1} parent=99 // pred_region
          %s1757 = sand.u32 %s252, 1
          %s1758 = scalar_lea.sflag [#allocation10], %s1757
          %s1759 = sand.u32 %s252, 1
          %s1760 = smul.addr %s1759, 8
          %s1761 = scalar_lea.vmem [#allocation17], %s1760
          %1763 = dma.done %s1758, 128
        $region104: #{tpu_custom_call.1} parent=99 // pred_fallthru
          _
      $region100: #{tpu_custom_call.1} parent=5 // pred_fallthru
        _
    $region6: #{tpu_custom_call.1} parent=1 // loop_footer
      %s27 = sadd.s32 1, %s23
    $region7: #{tpu_custom_call.1} parent=1 // loop_footer_branch
      %22 = sbr.rel target = $region3
    $region8: #{tpu_custom_call.1} parent=1 // loop_exit
      _
    %1764 = vsyncpa [#allocation9], 1
    %s1765 = scalar_lea.sflag [#allocation9], 1
    %1766 = vsyncpa %s1765, 1
    %1767 = vsyncpa [#allocation12], 1
    %1768 = vsyncpa [#allocation15], 1
    %1769 = vsyncpa [#allocation10], 1
    %s1770 = scalar_lea.sflag [#allocation10], 1
    %1771 = vsyncpa %s1770, 1

</llo_original>
